<compile_context>
chip_gen: v6e
topology: v6e:2x2x1
jax: 0.10.0
libtpu: 0.0.40
codegen_flags: <defaults>
</compile_context>

<pallas_src>
import jax
import jax.numpy as jnp
from jax.experimental import pallas as pl
from jax.experimental.pallas import tpu as pltpu

LANE = 128        # padded logit width -> lane-dense output stores
_NEG = -1e30      # pad-column bias: exp() underflows to exactly 0 in softmax
TM_MAX = 256      # batch (M) tile: fills v6e/v7x MXU; v5e runs 2x128 passes

_COMPILER_PARAMS = pltpu.CompilerParams(
    dimension_semantics=("parallel",),      # batch grid -> v7x megacore split
    vmem_limit_bytes=24 << 20)


# ----------------------------------------------------------------------------
# Shared in-kernel helpers
# ----------------------------------------------------------------------------
def _bdot(x, w_bf16):
    """bf16 x bf16 MXU matmul with f32 accumulation."""
    return jnp.dot(x.astype(jnp.bfloat16), w_bf16,
                   preferred_element_type=jnp.float32)


def _log_softmax(logits):
    m = jnp.max(logits, axis=1, keepdims=True)
    s = logits - m
    return s - jnp.log(jnp.sum(jnp.exp(s), axis=1, keepdims=True))


def _cifar10_trunk(x0, w1q, s1, b1, w2, b2):
    """fc1 -> relu1 -> dp1 -> fc2 -> relu2 -> dp2 (dropout = identity, eval).

    fc1 uses int8 weight-only quantization: the int8 weight is upcast on the
    VPU (exact in bf16), the matmul accumulates in f32 on the MXU, and the
    per-output-channel scale is applied to the accumulator.
    """
    w1 = w1q.astype(jnp.float32).astype(jnp.bfloat16)   # int8 -> bf16 (exact)
    acc1 = jnp.dot(x0.astype(jnp.bfloat16), w1,
                   preferred_element_type=jnp.float32)
    h_fc1 = acc1 * s1 + b1
    h_relu1 = jnp.maximum(h_fc1, 0.0)
    h_fc2 = _bdot(h_relu1, w2) + b2
    h_relu2 = jnp.maximum(h_fc2, 0.0)
    return h_fc2, h_relu2


def _bridge_cifar100(h_fc2, h_relu2, b2):
    """Bridged cifar100 path, folded algebraically (bit-for-bit w.r.t. the
    PyTorch loop up to bf16/f32 rounding):
      'fc1' : x = h_fc1 + fc1(x0)     == 2*h_fc1        (cached == recomputed)
      'relu1': x = h_relu1 + relu(x)  == 3*h_relu1      (relu(2a) == 2*relu(a))
      'dp1' : x = h_relu1 + x         == 4*h_relu1      (dropout == identity)
      'fc2' : x = h_fc2 + fc2(x)      == h_fc2 + 4*(h_fc2 - b2) + b2
                                      == 5*h_fc2 - 3*b2 (no 2nd 512x128 matmul)
    """
    x = 5.0 * h_fc2 - 3.0 * b2                   # 'fc1'+'relu1'+'dp1'+'fc2'
    x = h_relu2 + jnp.maximum(x, 0.0)            # 'relu2'
    x = h_relu2 + x                              # 'dp2' (dropout=identity, eval)
    return x


# ----------------------------------------------------------------------------
# Pallas kernels
# ----------------------------------------------------------------------------
def cifar10_kernel(x0_ref, w1q_ref, s1_ref, b1_ref, w2_ref, b2_ref,
                   wl_ref, bl_ref, out_ref):
    _, h_relu2 = _cifar10_trunk(x0_ref[...], w1q_ref[...], s1_ref[...],
                                b1_ref[...], w2_ref[...], b2_ref[...])
    out_ref[...] = _log_softmax(_bdot(h_relu2, wl_ref[...]) + bl_ref[...])


def cifar100_kernel(x0_ref, w1q_ref, s1_ref, b1_ref, w2_ref, b2_ref,
                    wl_ref, bl_ref, out_ref):
    h_fc2, h_relu2 = _cifar10_trunk(x0_ref[...], w1q_ref[...], s1_ref[...],
                                    b1_ref[...], w2_ref[...], b2_ref[...])
    x = _bridge_cifar100(h_fc2, h_relu2, b2_ref[...])
    out_ref[...] = _log_softmax(_bdot(x, wl_ref[...]) + bl_ref[...])


def fused_kernel(x0_ref, w1q_ref, s1_ref, b1_ref, w2_ref, b2_ref,
                 wl10_ref, bl10_ref, wl100_ref, bl100_ref,
                 out10_ref, out100_ref):
    """Both routes in one call: shares DMA + cached cifar10 activations."""
    h_fc2, h_relu2 = _cifar10_trunk(x0_ref[...], w1q_ref[...], s1_ref[...],
                                    b1_ref[...], w2_ref[...], b2_ref[...])
    out10_ref[...] = _log_softmax(_bdot(h_relu2, wl10_ref[...]) + bl10_ref[...])
    x = _bridge_cifar100(h_fc2, h_relu2, b2_ref[...])
    out100_ref[...] = _log_softmax(_bdot(x, wl100_ref[...]) + bl100_ref[...])


# ----------------------------------------------------------------------------
# Wrappers
# ----------------------------------------------------------------------------
def _round_up(x, m):
    return (x + m - 1) // m * m


def _cost(args, n_out, bp, flops):
    in_bytes = sum(int(a.size) * a.dtype.itemsize for a in args)
    return pl.CostEstimate(
        flops=int(flops),
        transcendentals=int(n_out * bp * (LANE + 1)),
        bytes_accessed=int(in_bytes + n_out * bp * LANE * 4))


def _call(kernel, x0, wargs, n_out, tm, flops):
    """Batch-gridded call: x0/out tiled over M, weights VMEM-resident."""
    bp, k = x0.shape
    grid = (bp // tm,)
    x0_spec = pl.BlockSpec((tm, k), lambda i: (i, 0))
    w_specs = [pl.BlockSpec(a.shape, lambda i, _r=a.ndim: (0,) * _r)
               for a in wargs]                       # constant -> fetched once
    out_shape = tuple(jax.ShapeDtypeStruct((bp, LANE), jnp.float32)
                      for _ in range(n_out))
    out_specs = tuple(pl.BlockSpec((tm, LANE), lambda i: (i, 0))
                      for _ in range(n_out))
    if n_out == 1:
        out_shape, out_specs = out_shape[0], out_specs[0]
    args = (x0, *wargs)
    return pl.pallas_call(
        kernel,
        out_shape=out_shape,
        grid=grid,
        in_specs=[x0_spec, *w_specs],
        out_specs=out_specs,
        compiler_params=_COMPILER_PARAMS,
        cost_estimate=_cost(args, n_out, bp, flops),
    )(*args)


def _pool_and_pad(feat_nchw):
    """AdaptiveAvgPool2d((1,1)) + flatten in XLA; pad batch to the M tile."""
    x0 = jnp.mean(feat_nchw, axis=(2, 3)).astype(jnp.bfloat16)
    b = x0.shape[0]
    tm = min(TM_MAX, _round_up(b, 16))      # >=16 rows: full packed bf16 vregs
    bp = _round_up(b, tm)
    if bp != b:
        x0 = jnp.pad(x0, ((0, bp - b), (0, 0)))
    return x0, b, tm


def bridgenet_forward(feat_nchw, kp, route):
    """Single-route forward, matching BridgeNet.forward(self.route=route)."""
    x0, b, tm = _pool_and_pad(feat_nchw)
    bp = x0.shape[0]
    if route == "cifar10":
        wargs = (kp["w1q"], kp["s1"], kp["b1"], kp["w2"], kp["b2"],
                 kp["wl10"], kp["bl10"])
        flops = 2 * bp * (2048 * 512 + 512 * 128 + 128 * LANE)
        return _call(cifar10_kernel, x0, wargs, 1, tm, flops)[:b, :10]
    elif route == "cifar100":
        wargs = (kp["w1q"], kp["s1"], kp["b1"], kp["w2"], kp["b2"],
                 kp["wl100"], kp["bl100"])
        flops = 2 * bp * (2048 * 512 + 512 * 128 + 128 * LANE)
        return _call(cifar100_kernel, x0, wargs, 1, tm, flops)[:b, :100]
    raise ValueError("Route is not set!")


def bridgenet_forward_both(feat_nchw, kp):
    """Fused dual-route forward (production path): one pallas_call, two outputs."""
    x0, b, tm = _pool_and_pad(feat_nchw)
    bp = x0.shape[0]
    wargs = (kp["w1q"], kp["s1"], kp["b1"], kp["w2"], kp["b2"],
             kp["wl10"], kp["bl10"], kp["wl100"], kp["bl100"])
    flops = 2 * bp * (2048 * 512 + 512 * 128 + 2 * 128 * LANE)
    out10p, out100p = _call(fused_kernel, x0, wargs, 2, tm, flops)
    return out10p[:b, :10], out100p[:b, :100]


# ----------------------------------------------------------------------------
# Parameter init (PyTorch-style uniform) + packing for the kernel
# ----------------------------------------------------------------------------
def init_params(key):
    ks = jax.random.split(key, 8)

    def lin(kw, kb, fan_in, fan_out):
        bound = 1.0 / (float(fan_in) ** 0.5)
        w = jax.random.uniform(kw, (fan_in, fan_out), jnp.float32, -bound, bound)
        b = jax.random.uniform(kb, (1, fan_out), jnp.float32, -bound, bound)
        return w, b

    w1, b1 = lin(ks[0], ks[1], 2048, 512)        # cifar10 fc1
    w2, b2 = lin(ks[2], ks[3], 512, 128)         # cifar10 fc2
    wl10, bl10 = lin(ks[4], ks[5], 128, 10)      # cifar10 logit
    wl100, bl100 = lin(ks[6], ks[7], 128, 100)   # cifar100 logit
    return dict(w1=w1, b1=b1, w2=w2, b2=b2,
                wl10=wl10, bl10=bl10, wl100=wl100, bl100=bl100)


def pack_params(p):
    """int8 (per-channel) fc1 weight, bf16 other weights, f32 biases/scales;
    logit heads padded to 128 lanes."""
    def quant_int8(w):
        s = jnp.maximum(jnp.max(jnp.abs(w), axis=0, keepdims=True), 1e-12) / 127.0
        q = jnp.clip(jnp.round(w / s), -127.0, 127.0).astype(jnp.int8)
        return q, s.astype(jnp.float32)

    def pad_logit(w, b):
        din, dout = w.shape
        wp = jnp.zeros((din, LANE), jnp.float32).at[:, :dout].set(w)
        bp = jnp.full((1, LANE), _NEG, jnp.float32).at[:, :dout].set(b)
        return wp.astype(jnp.bfloat16), bp

    w1q, s1 = quant_int8(p["w1"])
    wl10, bl10 = pad_logit(p["wl10"], p["bl10"])
    wl100, bl100 = pad_logit(p["wl100"], p["bl100"])
    return dict(w1q=w1q, s1=s1, b1=p["b1"],
                w2=p["w2"].astype(jnp.bfloat16), b2=p["b2"],
                wl10=wl10, bl10=bl10, wl100=wl100, bl100=bl100)


# ----------------------------------------------------------------------------
# Pure-JAX reference: literal translation of the PyTorch forward, at the same
# quantization points as the kernel (int8 fc1 weight, bf16 casts elsewhere),
# with full-f32 HIGHEST-precision accumulation.
# ----------------------------------------------------------------------------
def reference_forward(feat_nchw, kp, route):
    def hdot(a, b):
        return jnp.dot(a, b, precision=jax.lax.Precision.HIGHEST)

    def qdot(x, w_bf16):
        return hdot(x.astype(jnp.bfloat16).astype(jnp.float32),
                    w_bf16.astype(jnp.float32))

    def fc1(x):
        # mirrors the kernel's weight-only quant: dot(x_bf16, q_int8) * s + b
        return hdot(x.astype(jnp.bfloat16).astype(jnp.float32),
                    kp["w1q"].astype(jnp.float32)) * kp["s1"] + kp["b1"]

    def logsm(z):
        m = jnp.max(z, axis=1, keepdims=True)
        s = z - m
        return s - jnp.log(jnp.sum(jnp.exp(s), axis=1, keepdims=True))

    x0 = jnp.mean(feat_nchw, axis=(2, 3))
    h_fc1 = fc1(x0)
    h_relu1 = jnp.maximum(h_fc1, 0.0)
    h_fc2 = qdot(h_relu1, kp["w2"]) + kp["b2"]
    h_relu2 = jnp.maximum(h_fc2, 0.0)

    if route == "cifar10":
        logits = qdot(h_relu2, kp["wl10"][:, :10]) + kp["bl10"][:, :10]
        return logsm(logits)

    # cifar100: literal translation of the PyTorch bridged loop
    x = h_fc1 + fc1(x0)                           # 'fc1'
    x = h_relu1 + jnp.maximum(x, 0.0)             # 'relu1'
    x = h_relu1 + x                               # 'dp1'
    x = h_fc2 + (qdot(x, kp["w2"]) + kp["b2"])    # 'fc2'
    x = h_relu2 + jnp.maximum(x, 0.0)             # 'relu2'
    x = h_relu2 + x                               # 'dp2'
    logits = qdot(x, kp["wl100"][:, :100]) + kp["bl100"][:, :100]
    return logsm(logits)


# ----------------------------------------------------------------------------
if __name__ == "__main__":
    key = jax.random.PRNGKey(0)
    k_feat, k_params = jax.random.split(key)

    B, C, H, W = 8, 2048, 2, 2      # small backbone-output feature map
    feat = jax.random.normal(k_feat, (B, C, H, W), jnp.float32)
    params = init_params(k_params)
    kp = pack_params(params)

    # Fused dual-route call (shares x0/w1/w2 DMA + cached cifar10 activations).
    out10, out100 = bridgenet_forward_both(feat, kp)
    out10 = jax.block_until_ready(out10)
    out100 = jax.block_until_ready(out100)

    # Single-route calls (match BridgeNet.forward API).
    s10 = jax.block_until_ready(bridgenet_forward(feat, kp, "cifar10"))
    s100 = jax.block_until_ready(bridgenet_forward(feat, kp, "cifar100"))

    ref10 = reference_forward(feat, kp, "cifar10")
    ref100 = reference_forward(feat, kp, "cifar100")

    assert out10.shape == (B, 10) and out100.shape == (B, 100)
    tol = 1e-3
    assert float(jnp.max(jnp.abs(out10 - ref10))) < tol
    assert float(jnp.max(jnp.abs(out100 - ref100))) < tol
    assert float(jnp.max(jnp.abs(s10 - ref10))) < tol
    assert float(jnp.max(jnp.abs(s100 - ref100))) < tol

    print("KERNEL_OK")
</pallas_src>

<mosaic_0001>
module attributes {stable_mosaic.version = 11 : i64} {
  func.func @fused_kernel(%arg0: i32, %arg1: memref<16x2048xbf16, #tpu.memory_space<vmem>>, %arg2: memref<2048x512xi8, #tpu.memory_space<vmem>>, %arg3: memref<1x512xf32, #tpu.memory_space<vmem>>, %arg4: memref<1x512xf32, #tpu.memory_space<vmem>>, %arg5: memref<512x128xbf16, #tpu.memory_space<vmem>>, %arg6: memref<1x128xf32, #tpu.memory_space<vmem>>, %arg7: memref<128x128xbf16, #tpu.memory_space<vmem>>, %arg8: memref<1x128xf32, #tpu.memory_space<vmem>>, %arg9: memref<128x128xbf16, #tpu.memory_space<vmem>>, %arg10: memref<1x128xf32, #tpu.memory_space<vmem>>, %arg11: memref<16x128xf32, #tpu.memory_space<vmem>>, %arg12: memref<16x128xf32, #tpu.memory_space<vmem>>) attributes {dimension_semantics = [#tpu.dimension_semantics<parallel>], iteration_bounds = array<i64: 1>, scalar_prefetch = 0 : i64, scratch_operands = 0 : i64, tpu.core_type = #tpu.core_type<tc>, window_params = [{transform_indices = @transform_0, window_bounds = array<i64: 16, 2048>}, {pipeline_mode = #tpu.pipeline_mode<synchronous>, transform_indices = @transform_1, window_bounds = array<i64: 2048, 512>}, {pipeline_mode = #tpu.pipeline_mode<synchronous>, transform_indices = @transform_2, window_bounds = array<i64: 1, 512>}, {pipeline_mode = #tpu.pipeline_mode<synchronous>, transform_indices = @transform_3, window_bounds = array<i64: 1, 512>}, {pipeline_mode = #tpu.pipeline_mode<synchronous>, transform_indices = @transform_4, window_bounds = array<i64: 512, 128>}, {pipeline_mode = #tpu.pipeline_mode<synchronous>, transform_indices = @transform_5, window_bounds = array<i64: 1, 128>}, {pipeline_mode = #tpu.pipeline_mode<synchronous>, transform_indices = @transform_6, window_bounds = array<i64: 128, 128>}, {pipeline_mode = #tpu.pipeline_mode<synchronous>, transform_indices = @transform_7, window_bounds = array<i64: 1, 128>}, {pipeline_mode = #tpu.pipeline_mode<synchronous>, transform_indices = @transform_8, window_bounds = array<i64: 128, 128>}, {pipeline_mode = #tpu.pipeline_mode<synchronous>, transform_indices = @transform_9, window_bounds = array<i64: 1, 128>}, {transform_indices = @transform_10, window_bounds = array<i64: 16, 128>}, {transform_indices = @transform_11, window_bounds = array<i64: 16, 128>}]} {
    %c0 = arith.constant 0 : index
    %c0_0 = arith.constant 0 : index
    %0 = vector.load %arg1[%c0, %c0_0] : memref<16x2048xbf16, #tpu.memory_space<vmem>>, vector<16x2048xbf16>
    %c0_1 = arith.constant 0 : index
    %c0_2 = arith.constant 0 : index
    %1 = vector.load %arg2[%c0_1, %c0_2] : memref<2048x512xi8, #tpu.memory_space<vmem>>, vector<2048x512xi8>
    %c0_3 = arith.constant 0 : index
    %c0_4 = arith.constant 0 : index
    %2 = vector.load %arg3[%c0_3, %c0_4] : memref<1x512xf32, #tpu.memory_space<vmem>>, vector<1x512xf32>
    %c0_5 = arith.constant 0 : index
    %c0_6 = arith.constant 0 : index
    %3 = vector.load %arg4[%c0_5, %c0_6] : memref<1x512xf32, #tpu.memory_space<vmem>>, vector<1x512xf32>
    %c0_7 = arith.constant 0 : index
    %c0_8 = arith.constant 0 : index
    %4 = vector.load %arg5[%c0_7, %c0_8] : memref<512x128xbf16, #tpu.memory_space<vmem>>, vector<512x128xbf16>
    %c0_9 = arith.constant 0 : index
    %c0_10 = arith.constant 0 : index
    %5 = vector.load %arg6[%c0_9, %c0_10] : memref<1x128xf32, #tpu.memory_space<vmem>>, vector<1x128xf32>
    %6 = arith.sitofp %1 : vector<2048x512xi8> to vector<2048x512xf32>
    %7 = arith.truncf %6 : vector<2048x512xf32> to vector<2048x512xbf16>
    %cst = arith.constant dense<0.000000e+00> : vector<16x512xf32>
    %8 = tpu.matmul %0, %7, %cst {dimension_numbers = #tpu.dot_dimension_numbers<[1], [0], [0], [1], [0, 0, 1, 1], [], []>} : vector<16x2048xbf16>, vector<2048x512xbf16>, vector<16x512xf32> -> vector<16x512xf32>
    %9 = vector.broadcast %2 : vector<1x512xf32> to vector<16x512xf32>
    %10 = arith.mulf %8, %9 : vector<16x512xf32>
    %11 = vector.broadcast %3 : vector<1x512xf32> to vector<16x512xf32>
    %12 = arith.addf %10, %11 : vector<16x512xf32>
    %cst_11 = arith.constant 0.000000e+00 : f32
    %13 = vector.broadcast %cst_11 : f32 to vector<16x512xf32>
    %14 = arith.maximumf %12, %13 : vector<16x512xf32>
    %15 = arith.truncf %14 : vector<16x512xf32> to vector<16x512xbf16>
    %cst_12 = arith.constant dense<0.000000e+00> : vector<16x128xf32>
    %16 = tpu.matmul %15, %4, %cst_12 {dimension_numbers = #tpu.dot_dimension_numbers<[1], [0], [0], [1], [0, 0, 1, 1], [], []>} : vector<16x512xbf16>, vector<512x128xbf16>, vector<16x128xf32> -> vector<16x128xf32>
    %17 = vector.broadcast %5 : vector<1x128xf32> to vector<16x128xf32>
    %18 = arith.addf %16, %17 : vector<16x128xf32>
    %cst_13 = arith.constant 0.000000e+00 : f32
    %19 = vector.broadcast %cst_13 : f32 to vector<16x128xf32>
    %20 = arith.maximumf %18, %19 : vector<16x128xf32>
    %c0_14 = arith.constant 0 : index
    %c0_15 = arith.constant 0 : index
    %21 = vector.load %arg7[%c0_14, %c0_15] : memref<128x128xbf16, #tpu.memory_space<vmem>>, vector<128x128xbf16>
    %22 = arith.truncf %20 : vector<16x128xf32> to vector<16x128xbf16>
    %cst_16 = arith.constant dense<0.000000e+00> : vector<16x128xf32>
    %23 = tpu.matmul %22, %21, %cst_16 {dimension_numbers = #tpu.dot_dimension_numbers<[1], [0], [0], [1], [0, 0, 1, 1], [], []>} : vector<16x128xbf16>, vector<128x128xbf16>, vector<16x128xf32> -> vector<16x128xf32>
    %c0_17 = arith.constant 0 : index
    %c0_18 = arith.constant 0 : index
    %24 = vector.load %arg8[%c0_17, %c0_18] : memref<1x128xf32, #tpu.memory_space<vmem>>, vector<1x128xf32>
    %25 = vector.broadcast %24 : vector<1x128xf32> to vector<16x128xf32>
    %26 = arith.addf %23, %25 : vector<16x128xf32>
    %cst_19 = arith.constant dense<0xFF800000> : vector<16xf32>
    %27 = vector.multi_reduction <maximumf>, %26, %cst_19 [1] : vector<16x128xf32> to vector<16xf32>
    %28 = vector.shape_cast %27 : vector<16xf32> to vector<16x1xf32>
    %29 = vector.broadcast %28 : vector<16x1xf32> to vector<16x128xf32>
    %30 = arith.subf %26, %29 : vector<16x128xf32>
    %31 = math.exp %30 : vector<16x128xf32>
    %cst_20 = arith.constant dense<0.000000e+00> : vector<16xf32>
    %32 = vector.multi_reduction <add>, %31, %cst_20 [1] : vector<16x128xf32> to vector<16xf32>
    %33 = vector.shape_cast %32 : vector<16xf32> to vector<16x1xf32>
    %34 = math.log %33 : vector<16x1xf32>
    %35 = vector.broadcast %34 : vector<16x1xf32> to vector<16x128xf32>
    %36 = arith.subf %30, %35 : vector<16x128xf32>
    %c0_21 = arith.constant 0 : index
    %c0_22 = arith.constant 0 : index
    %37 = vector.load %arg11[%c0_21, %c0_22] : memref<16x128xf32, #tpu.memory_space<vmem>>, vector<16x128xf32>
    tpu.vector_store %arg11[%c0_21, %c0_22], %36 {strides = array<i32>} : memref<16x128xf32, #tpu.memory_space<vmem>>, vector<16x128xf32>,
    %c0_23 = arith.constant 0 : index
    %c0_24 = arith.constant 0 : index
    %38 = vector.load %arg6[%c0_23, %c0_24] : memref<1x128xf32, #tpu.memory_space<vmem>>, vector<1x128xf32>
    %cst_25 = arith.constant 5.000000e+00 : f32
    %39 = vector.broadcast %cst_25 : f32 to vector<16x128xf32>
    %40 = arith.mulf %39, %18 : vector<16x128xf32>
    %cst_26 = arith.constant 3.000000e+00 : f32
    %41 = vector.broadcast %cst_26 : f32 to vector<1x128xf32>
    %42 = arith.mulf %41, %38 : vector<1x128xf32>
    %43 = vector.broadcast %42 : vector<1x128xf32> to vector<16x128xf32>
    %44 = arith.subf %40, %43 : vector<16x128xf32>
    %cst_27 = arith.constant 0.000000e+00 : f32
    %45 = vector.broadcast %cst_27 : f32 to vector<16x128xf32>
    %46 = arith.maximumf %44, %45 : vector<16x128xf32>
    %47 = arith.addf %20, %46 : vector<16x128xf32>
    %48 = arith.addf %20, %47 : vector<16x128xf32>
    %c0_28 = arith.constant 0 : index
    %c0_29 = arith.constant 0 : index
    %49 = vector.load %arg9[%c0_28, %c0_29] : memref<128x128xbf16, #tpu.memory_space<vmem>>, vector<128x128xbf16>
    %50 = arith.truncf %48 : vector<16x128xf32> to vector<16x128xbf16>
    %cst_30 = arith.constant dense<0.000000e+00> : vector<16x128xf32>
    %51 = tpu.matmul %50, %49, %cst_30 {dimension_numbers = #tpu.dot_dimension_numbers<[1], [0], [0], [1], [0, 0, 1, 1], [], []>} : vector<16x128xbf16>, vector<128x128xbf16>, vector<16x128xf32> -> vector<16x128xf32>
    %c0_31 = arith.constant 0 : index
    %c0_32 = arith.constant 0 : index
    %52 = vector.load %arg10[%c0_31, %c0_32] : memref<1x128xf32, #tpu.memory_space<vmem>>, vector<1x128xf32>
    %53 = vector.broadcast %52 : vector<1x128xf32> to vector<16x128xf32>
    %54 = arith.addf %51, %53 : vector<16x128xf32>
    %cst_33 = arith.constant dense<0xFF800000> : vector<16xf32>
    %55 = vector.multi_reduction <maximumf>, %54, %cst_33 [1] : vector<16x128xf32> to vector<16xf32>
    %56 = vector.shape_cast %55 : vector<16xf32> to vector<16x1xf32>
    %57 = vector.broadcast %56 : vector<16x1xf32> to vector<16x128xf32>
    %58 = arith.subf %54, %57 : vector<16x128xf32>
    %59 = math.exp %58 : vector<16x128xf32>
    %cst_34 = arith.constant dense<0.000000e+00> : vector<16xf32>
    %60 = vector.multi_reduction <add>, %59, %cst_34 [1] : vector<16x128xf32> to vector<16xf32>
    %61 = vector.shape_cast %60 : vector<16xf32> to vector<16x1xf32>
    %62 = math.log %61 : vector<16x1xf32>
    %63 = vector.broadcast %62 : vector<16x1xf32> to vector<16x128xf32>
    %64 = arith.subf %58, %63 : vector<16x128xf32>
    %c0_35 = arith.constant 0 : index
    %c0_36 = arith.constant 0 : index
    %65 = vector.load %arg12[%c0_35, %c0_36] : memref<16x128xf32, #tpu.memory_space<vmem>>, vector<16x128xf32>
    tpu.vector_store %arg12[%c0_35, %c0_36], %64 {strides = array<i32>} : memref<16x128xf32, #tpu.memory_space<vmem>>, vector<16x128xf32>,
    return
  }
  func.func @transform_0(%arg0: i32) -> (i32, i32) {
    %c0_i32 = arith.constant 0 : i32
    %c0_i32_0 = arith.constant 0 : i32
    return %arg0, %c0_i32 : i32, i32
  }
  func.func @transform_1(%arg0: i32) -> (i32, i32) {
    %c0_i32 = arith.constant 0 : i32
    %c0_i32_0 = arith.constant 0 : i32
    %c0_i32_1 = arith.constant 0 : i32
    return %c0_i32, %c0_i32_0 : i32, i32
  }
  func.func @transform_2(%arg0: i32) -> (i32, i32) {
    %c0_i32 = arith.constant 0 : i32
    %c0_i32_0 = arith.constant 0 : i32
    %c0_i32_1 = arith.constant 0 : i32
    return %c0_i32, %c0_i32_0 : i32, i32
  }
  func.func @transform_3(%arg0: i32) -> (i32, i32) {
    %c0_i32 = arith.constant 0 : i32
    %c0_i32_0 = arith.constant 0 : i32
    %c0_i32_1 = arith.constant 0 : i32
    return %c0_i32, %c0_i32_0 : i32, i32
  }
  func.func @transform_4(%arg0: i32) -> (i32, i32) {
    %c0_i32 = arith.constant 0 : i32
    %c0_i32_0 = arith.constant 0 : i32
    %c0_i32_1 = arith.constant 0 : i32
    return %c0_i32, %c0_i32_0 : i32, i32
  }
  func.func @transform_5(%arg0: i32) -> (i32, i32) {
    %c0_i32 = arith.constant 0 : i32
    %c0_i32_0 = arith.constant 0 : i32
    %c0_i32_1 = arith.constant 0 : i32
    return %c0_i32, %c0_i32_0 : i32, i32
  }
  func.func @transform_6(%arg0: i32) -> (i32, i32) {
    %c0_i32 = arith.constant 0 : i32
    %c0_i32_0 = arith.constant 0 : i32
    %c0_i32_1 = arith.constant 0 : i32
    return %c0_i32, %c0_i32_0 : i32, i32
  }
  func.func @transform_7(%arg0: i32) -> (i32, i32) {
    %c0_i32 = arith.constant 0 : i32
    %c0_i32_0 = arith.constant 0 : i32
    %c0_i32_1 = arith.constant 0 : i32
    return %c0_i32, %c0_i32_0 : i32, i32
  }
  func.func @transform_8(%arg0: i32) -> (i32, i32) {
    %c0_i32 = arith.constant 0 : i32
    %c0_i32_0 = arith.constant 0 : i32
    %c0_i32_1 = arith.constant 0 : i32
    return %c0_i32, %c0_i32_0 : i32, i32
  }
  func.func @transform_9(%arg0: i32) -> (i32, i32) {
    %c0_i32 = arith.constant 0 : i32
    %c0_i32_0 = arith.constant 0 : i32
    %c0_i32_1 = arith.constant 0 : i32
    return %c0_i32, %c0_i32_0 : i32, i32
  }
  func.func @transform_10(%arg0: i32) -> (i32, i32) {
    %c0_i32 = arith.constant 0 : i32
    %c0_i32_0 = arith.constant 0 : i32
    return %arg0, %c0_i32 : i32, i32
  }
  func.func @transform_11(%arg0: i32) -> (i32, i32) {
    %c0_i32 = arith.constant 0 : i32
    %c0_i32_0 = arith.constant 0 : i32
    return %arg0, %c0_i32 : i32, i32
  }
}

</mosaic_0001>

<llo_original>
// kernel: tpu_custom_call.1
$region0: #{tpu_custom_call.1}
  #allocation0 [shape = 'u32[]', space=smem, size = 0x4, offset = 0x4, fixed_abs, tag = 'smem constant byte address 0x4 - core index']
  #allocation1 [shape = 'u32[144,128]{1,0:T(1,128)}', space=vmem, size = 0x12000, scoped, tag = 'internal scratch']
  %s0 = inlined_call_operand.hbm [shape: bf16[16,2048], index: 0, kind: input, shape index: {}]
  %s1 = inlined_call_operand.hbm [shape: s8[2048,512], index: 1, kind: input, shape index: {}]
  %s2 = inlined_call_operand.hbm [shape: f32[1,512], index: 2, kind: input, shape index: {}]
  %s3 = inlined_call_operand.vmem [shape: f32[1,512], index: 3, kind: input, shape index: {}]
  %s4 = inlined_call_operand.hbm [shape: bf16[512,128], index: 4, kind: input, shape index: {}]
  %s5 = inlined_call_operand.vmem [shape: f32[1,128], index: 5, kind: input, shape index: {}]
  %s6 = inlined_call_operand.hbm [shape: bf16[128,128], index: 6, kind: input, shape index: {}]
  %s7 = inlined_call_operand.vmem [shape: f32[1,128], index: 7, kind: input, shape index: {}]
  %s8 = inlined_call_operand.hbm [shape: bf16[128,128], index: 8, kind: input, shape index: {}]
  %s9 = inlined_call_operand.vmem [shape: f32[1,128], index: 9, kind: input, shape index: {}]
  %s10 = inlined_call_operand.hbm [shape: f32[16,128], index: 10, kind: output, shape index: {0}]
  %s11 = inlined_call_operand.hbm [shape: f32[16,128], index: 11, kind: output, shape index: {1}]
  %12 = xla_tuple %s10, %s11
  %s13 = sld [smem:[#allocation0]]
  $region82: #{tpu_custom_call.1} parent=0
    _
  %s15 = ssub.s32 1, %s13
  %s16 = scalar_select 0, %s15, %s13
  $region1: #{tpu_custom_call.1} parent=0
    #allocation2 [shape = 'u8[65536]{0}', space=vmem, size = 0x10000, scoped, tag = 'input window, operand 0, single buffered']
    #allocation3 [shape = 's32[1]{0}', space=sflag, size = 0x4, scoped, tag = 'scoped memory for tpu_custom_call.1']
    #allocation4 [shape = 's32[1]{0}', space=sflag, size = 0x4, scoped, tag = 'scoped memory for tpu_custom_call.1']
    #allocation5 [shape = 'u8[1048576]{0}', space=vmem, size = 0x100000, scoped, tag = 'input window, operand 1, single buffered']
    #allocation6 [shape = 's32[1]{0}', space=sflag, size = 0x4, scoped, tag = 'scoped memory for tpu_custom_call.1']
    #allocation7 [shape = 'u8[2048]{0}', space=vmem, size = 0x800, scoped, tag = 'input window, operand 2, single buffered']
    #allocation8 [shape = 'u8[131072]{0}', space=vmem, size = 0x20000, scoped, tag = 'input window, operand 4, single buffered']
    #allocation9 [shape = 's32[1]{0}', space=sflag, size = 0x4, scoped, tag = 'scoped memory for tpu_custom_call.1']
    #allocation10 [shape = 'u8[32768]{0}', space=vmem, size = 0x8000, scoped, tag = 'input window, operand 6, single buffered']
    #allocation11 [shape = 'u8[32768]{0}', space=vmem, size = 0x8000, scoped, tag = 'input window, operand 8, single buffered']
    #allocation12 [shape = 's32[1]{0}', space=sflag, size = 0x4, scoped, tag = 'scoped memory for tpu_custom_call.1']
    #allocation13 [shape = 'u8[8192]{0}', space=vmem, size = 0x2000, scoped, tag = 'output window, operand 0, single buffered']
    #allocation14 [shape = 'u8[8192]{0}', space=vmem, size = 0x2000, scoped, tag = 'output window, operand 1, single buffered']
    #allocation15 [shape = 's32[1]{0}', space=sflag, size = 0x4, scoped, tag = 'scoped memory for tpu_custom_call.1']
    %17 = vsyncpa [#allocation3], 0
    %18 = vsyncpa [#allocation6], 0
    %19 = vsyncpa [#allocation9], 0
    %20 = vsyncpa [#allocation12], 0
    %21 = vsyncpa [#allocation4], 0
    %22 = vsyncpa [#allocation15], 0
    // Predicated region
    $region2: #{tpu_custom_call.1} parent=1 // pred_check
      _
    $region3: #{tpu_custom_call.1} parent=1 // pred_check_branch
      %24 = sbr.rel (0) target = $region5
    $region4: #{tpu_custom_call.1} parent=1 // pred_region
      %s26 = ssub.s32 2048, 2048
      %27 = vsyncadd [#allocation3], %s26
      %s28 = sshll.u32 [#allocation2], 4
      %s29 = int_to_ptr.vmem [resolvable:$true] %s28
      %34 = dma.hbm_to_vmem [thread:$0]  %s0, 2048, %s29, [#allocation3], 1024, 1024, 64
    $region5: #{tpu_custom_call.1} parent=1 // pred_fallthru
      _
    // Predicated region
    $region6: #{tpu_custom_call.1} parent=1 // pred_check
      _
    $region7: #{tpu_custom_call.1} parent=1 // pred_check_branch
      %36 = sbr.rel (0) target = $region9
    $region8: #{tpu_custom_call.1} parent=1 // pred_region
      %s38 = ssub.s32 32768, 32768
      %39 = vsyncadd [#allocation6], %s38
      %s40 = sshll.u32 [#allocation5], 4
      %s41 = int_to_ptr.vmem [resolvable:$true] %s40
      %46 = dma.hbm_to_vmem [thread:$0]  %s1, 32768, %s41, [#allocation6], 512, 512, 32
    $region9: #{tpu_custom_call.1} parent=1 // pred_fallthru
      _
    // Predicated region
    $region10: #{tpu_custom_call.1} parent=1 // pred_check
      _
    $region11: #{tpu_custom_call.1} parent=1 // pred_check_branch
      %48 = sbr.rel (0) target = $region13
    $region12: #{tpu_custom_call.1} parent=1 // pred_region
      %s50 = ssub.s32 64, 64
      %51 = vsyncadd [#allocation6], %s50
      %s53 = sshll.u32 [#allocation7], 4
      %s54 = int_to_ptr.vmem [resolvable:$true] %s53
      %56 = dma.hbm_to_vmem [thread:$0]  %s2, 64, %s54, [#allocation6]
    $region13: #{tpu_custom_call.1} parent=1 // pred_fallthru
      _
    // Predicated region
    $region14: #{tpu_custom_call.1} parent=1 // pred_check
      _
    $region15: #{tpu_custom_call.1} parent=1 // pred_check_branch
      %58 = sbr.rel (0) target = $region17
    $region16: #{tpu_custom_call.1} parent=1 // pred_region
      _
    $region17: #{tpu_custom_call.1} parent=1 // pred_fallthru
      _
    // Predicated region
    $region18: #{tpu_custom_call.1} parent=1 // pred_check
      _
    $region19: #{tpu_custom_call.1} parent=1 // pred_check_branch
      %60 = sbr.rel (0) target = $region21
    $region20: #{tpu_custom_call.1} parent=1 // pred_region
      %s62 = ssub.s32 4096, 4096
      %63 = vsyncadd [#allocation9], %s62
      %s64 = sshll.u32 [#allocation8], 4
      %s65 = int_to_ptr.vmem [resolvable:$true] %s64
      %70 = dma.hbm_to_vmem [thread:$0]  %s4, 4096, %s65, [#allocation9], 64, 64, 4
    $region21: #{tpu_custom_call.1} parent=1 // pred_fallthru
      _
    // Predicated region
    $region22: #{tpu_custom_call.1} parent=1 // pred_check
      _
    $region23: #{tpu_custom_call.1} parent=1 // pred_check_branch
      %72 = sbr.rel (0) target = $region25
    $region24: #{tpu_custom_call.1} parent=1 // pred_region
      _
    $region25: #{tpu_custom_call.1} parent=1 // pred_fallthru
      _
    // Predicated region
    $region26: #{tpu_custom_call.1} parent=1 // pred_check
      _
    $region27: #{tpu_custom_call.1} parent=1 // pred_check_branch
      %74 = sbr.rel (0) target = $region29
    $region28: #{tpu_custom_call.1} parent=1 // pred_region
      %s76 = ssub.s32 1024, 1024
      %77 = vsyncadd [#allocation9], %s76
      %s78 = sshll.u32 [#allocation10], 4
      %s79 = int_to_ptr.vmem [resolvable:$true] %s78
      %84 = dma.hbm_to_vmem [thread:$0]  %s6, 1024, %s79, [#allocation9], 64, 64, 4
    $region29: #{tpu_custom_call.1} parent=1 // pred_fallthru
      _
    // Predicated region
    $region30: #{tpu_custom_call.1} parent=1 // pred_check
      _
    $region31: #{tpu_custom_call.1} parent=1 // pred_check_branch
      %86 = sbr.rel (0) target = $region33
    $region32: #{tpu_custom_call.1} parent=1 // pred_region
      _
    $region33: #{tpu_custom_call.1} parent=1 // pred_fallthru
      _
    // Predicated region
    $region34: #{tpu_custom_call.1} parent=1 // pred_check
      _
    $region35: #{tpu_custom_call.1} parent=1 // pred_check_branch
      %88 = sbr.rel (0) target = $region37
    $region36: #{tpu_custom_call.1} parent=1 // pred_region
      %s90 = ssub.s32 1024, 1024
      %91 = vsyncadd [#allocation12], %s90
      %s92 = sshll.u32 [#allocation11], 4
      %s93 = int_to_ptr.vmem [resolvable:$true] %s92
      %98 = dma.hbm_to_vmem [thread:$0]  %s8, 1024, %s93, [#allocation12], 64, 64, 4
    $region37: #{tpu_custom_call.1} parent=1 // pred_fallthru
      _
    // Predicated region
    $region38: #{tpu_custom_call.1} parent=1 // pred_check
      _
    $region39: #{tpu_custom_call.1} parent=1 // pred_check_branch
      %100 = sbr.rel (0) target = $region41
    $region40: #{tpu_custom_call.1} parent=1 // pred_region
      _
    $region41: #{tpu_custom_call.1} parent=1 // pred_fallthru
      _
    // Predicated region
    $region42: #{tpu_custom_call.1} parent=1 // pred_check
      _
    $region43: #{tpu_custom_call.1} parent=1 // pred_check_branch
      %102 = sbr.rel (0) target = $region45
    $region44: #{tpu_custom_call.1} parent=1 // pred_region
      %103 = dma.done [#allocation3], 2048
    $region45: #{tpu_custom_call.1} parent=1 // pred_fallthru
      _
    // Predicated region
    $region46: #{tpu_custom_call.1} parent=1 // pred_check
      _
    $region47: #{tpu_custom_call.1} parent=1 // pred_check_branch
      %105 = sbr.rel (0) target = $region49
    $region48: #{tpu_custom_call.1} parent=1 // pred_region
      %106 = dma.done [#allocation6], 32768
    $region49: #{tpu_custom_call.1} parent=1 // pred_fallthru
      _
    // Predicated region
    $region50: #{tpu_custom_call.1} parent=1 // pred_check
      _
    $region51: #{tpu_custom_call.1} parent=1 // pred_check_branch
      %108 = sbr.rel (0) target = $region53
    $region52: #{tpu_custom_call.1} parent=1 // pred_region
      %109 = dma.done [#allocation6], 64
    $region53: #{tpu_custom_call.1} parent=1 // pred_fallthru
      _
    // Predicated region
    $region54: #{tpu_custom_call.1} parent=1 // pred_check
      _
    $region55: #{tpu_custom_call.1} parent=1 // pred_check_branch
      %111 = sbr.rel (0) target = $region57
    $region56: #{tpu_custom_call.1} parent=1 // pred_region
      %112 = dma.done [#allocation9], 4096
    $region57: #{tpu_custom_call.1} parent=1 // pred_fallthru
      _
    // Predicated region
    $region58: #{tpu_custom_call.1} parent=1 // pred_check
      _
    $region59: #{tpu_custom_call.1} parent=1 // pred_check_branch
      %114 = sbr.rel (0) target = $region61
    $region60: #{tpu_custom_call.1} parent=1 // pred_region
      %115 = dma.done [#allocation9], 1024
    $region61: #{tpu_custom_call.1} parent=1 // pred_fallthru
      _
    // Predicated region
    $region62: #{tpu_custom_call.1} parent=1 // pred_check
      _
    $region63: #{tpu_custom_call.1} parent=1 // pred_check_branch
      %117 = sbr.rel (0) target = $region65
    $region64: #{tpu_custom_call.1} parent=1 // pred_region
      %118 = dma.done [#allocation12], 1024
    $region65: #{tpu_custom_call.1} parent=1 // pred_fallthru
      _
    %v120 = vld [vmem:[#allocation2] sm:$0xff]
    %v121 = vld [vmem:[#allocation2 + $0x8] sm:$0xff]
    %v122 = vld [vmem:[#allocation2 + $0x10] sm:$0xff]
    %v123 = vld [vmem:[#allocation2 + $0x18] sm:$0xff]
    %v124 = vld [vmem:[#allocation2 + $0x20] sm:$0xff]
    %v125 = vld [vmem:[#allocation2 + $0x28] sm:$0xff]
    %v126 = vld [vmem:[#allocation2 + $0x30] sm:$0xff]
    %v127 = vld [vmem:[#allocation2 + $0x38] sm:$0xff]
    %v128 = vld [vmem:[#allocation2 + $0x40] sm:$0xff]
    %v129 = vld [vmem:[#allocation2 + $0x48] sm:$0xff]
    %v130 = vld [vmem:[#allocation2 + $0x50] sm:$0xff]
    %v131 = vld [vmem:[#allocation2 + $0x58] sm:$0xff]
    %v132 = vld [vmem:[#allocation2 + $0x60] sm:$0xff]
    %v133 = vld [vmem:[#allocation2 + $0x68] sm:$0xff]
    %v134 = vld [vmem:[#allocation2 + $0x70] sm:$0xff]
    %v135 = vld [vmem:[#allocation2 + $0x78] sm:$0xff]
    %v136 = vld [vmem:[#allocation5] sm:$0xff]
    %v137 = vld [vmem:[#allocation5 + $0x8] sm:$0xff]
    %v138 = vld [vmem:[#allocation5 + $0x10] sm:$0xff]
    %v139 = vld [vmem:[#allocation5 + $0x18] sm:$0xff]
    %v140 = vld [vmem:[#allocation5 + $0x20] sm:$0xff]
    %v141 = vld [vmem:[#allocation5 + $0x28] sm:$0xff]
    %v142 = vld [vmem:[#allocation5 + $0x30] sm:$0xff]
    %v143 = vld [vmem:[#allocation5 + $0x38] sm:$0xff]
    %v144 = vld [vmem:[#allocation5 + $0x40] sm:$0xff]
    %v145 = vld [vmem:[#allocation5 + $0x48] sm:$0xff]
    %v146 = vld [vmem:[#allocation5 + $0x50] sm:$0xff]
    %v147 = vld [vmem:[#allocation5 + $0x58] sm:$0xff]
    %v148 = vld [vmem:[#allocation5 + $0x60] sm:$0xff]
    %v149 = vld [vmem:[#allocation5 + $0x68] sm:$0xff]
    %v150 = vld [vmem:[#allocation5 + $0x70] sm:$0xff]
    %v151 = vld [vmem:[#allocation5 + $0x78] sm:$0xff]
    %v152 = vld [vmem:[#allocation5 + $0x80] sm:$0xff]
    %v153 = vld [vmem:[#allocation5 + $0x88] sm:$0xff]
    %v154 = vld [vmem:[#allocation5 + $0x90] sm:$0xff]
    %v155 = vld [vmem:[#allocation5 + $0x98] sm:$0xff]
    %v156 = vld [vmem:[#allocation5 + $0xa0] sm:$0xff]
    %v157 = vld [vmem:[#allocation5 + $0xa8] sm:$0xff]
    %v158 = vld [vmem:[#allocation5 + $0xb0] sm:$0xff]
    %v159 = vld [vmem:[#allocation5 + $0xb8] sm:$0xff]
    %v160 = vld [vmem:[#allocation5 + $0xc0] sm:$0xff]
    %v161 = vld [vmem:[#allocation5 + $0xc8] sm:$0xff]
    %v162 = vld [vmem:[#allocation5 + $0xd0] sm:$0xff]
    %v163 = vld [vmem:[#allocation5 + $0xd8] sm:$0xff]
    %v164 = vld [vmem:[#allocation5 + $0xe0] sm:$0xff]
    %v165 = vld [vmem:[#allocation5 + $0xe8] sm:$0xff]
    %v166 = vld [vmem:[#allocation5 + $0xf0] sm:$0xff]
    %v167 = vld [vmem:[#allocation5 + $0xf8] sm:$0xff]
    %v168 = vld [vmem:[#allocation5 + $0x100] sm:$0xff]
    %v169 = vld [vmem:[#allocation5 + $0x108] sm:$0xff]
    %v170 = vld [vmem:[#allocation5 + $0x110] sm:$0xff]
    %v171 = vld [vmem:[#allocation5 + $0x118] sm:$0xff]
    %v172 = vld [vmem:[#allocation5 + $0x120] sm:$0xff]
    %v173 = vld [vmem:[#allocation5 + $0x128] sm:$0xff]
    %v174 = vld [vmem:[#allocation5 + $0x130] sm:$0xff]
    %v175 = vld [vmem:[#allocation5 + $0x138] sm:$0xff]
    %v176 = vld [vmem:[#allocation5 + $0x140] sm:$0xff]
    %v177 = vld [vmem:[#allocation5 + $0x148] sm:$0xff]
    %v178 = vld [vmem:[#allocation5 + $0x150] sm:$0xff]
    %v179 = vld [vmem:[#allocation5 + $0x158] sm:$0xff]
    %v180 = vld [vmem:[#allocation5 + $0x160] sm:$0xff]
    %v181 = vld [vmem:[#allocation5 + $0x168] sm:$0xff]
    %v182 = vld [vmem:[#allocation5 + $0x170] sm:$0xff]
    %v183 = vld [vmem:[#allocation5 + $0x178] sm:$0xff]
    %v184 = vld [vmem:[#allocation5 + $0x180] sm:$0xff]
    %v185 = vld [vmem:[#allocation5 + $0x188] sm:$0xff]
    %v186 = vld [vmem:[#allocation5 + $0x190] sm:$0xff]
    %v187 = vld [vmem:[#allocation5 + $0x198] sm:$0xff]
    %v188 = vld [vmem:[#allocation5 + $0x1a0] sm:$0xff]
    %v189 = vld [vmem:[#allocation5 + $0x1a8] sm:$0xff]
    %v190 = vld [vmem:[#allocation5 + $0x1b0] sm:$0xff]
    %v191 = vld [vmem:[#allocation5 + $0x1b8] sm:$0xff]
    %v192 = vld [vmem:[#allocation5 + $0x1c0] sm:$0xff]
    %v193 = vld [vmem:[#allocation5 + $0x1c8] sm:$0xff]
    %v194 = vld [vmem:[#allocation5 + $0x1d0] sm:$0xff]
    %v195 = vld [vmem:[#allocation5 + $0x1d8] sm:$0xff]
    %v196 = vld [vmem:[#allocation5 + $0x1e0] sm:$0xff]
    %v197 = vld [vmem:[#allocation5 + $0x1e8] sm:$0xff]
    %v198 = vld [vmem:[#allocation5 + $0x1f0] sm:$0xff]
    %v199 = vld [vmem:[#allocation5 + $0x1f8] sm:$0xff]
    %v200 = vld [vmem:[#allocation5 + $0x200] sm:$0xff]
    %v201 = vld [vmem:[#allocation5 + $0x208] sm:$0xff]
    %v202 = vld [vmem:[#allocation5 + $0x210] sm:$0xff]
    %v203 = vld [vmem:[#allocation5 + $0x218] sm:$0xff]
    %v204 = vld [vmem:[#allocation5 + $0x220] sm:$0xff]
    %v205 = vld [vmem:[#allocation5 + $0x228] sm:$0xff]
    %v206 = vld [vmem:[#allocation5 + $0x230] sm:$0xff]
    %v207 = vld [vmem:[#allocation5 + $0x238] sm:$0xff]
    %v208 = vld [vmem:[#allocation5 + $0x240] sm:$0xff]
    %v209 = vld [vmem:[#allocation5 + $0x248] sm:$0xff]
    %v210 = vld [vmem:[#allocation5 + $0x250] sm:$0xff]
    %v211 = vld [vmem:[#allocation5 + $0x258] sm:$0xff]
    %v212 = vld [vmem:[#allocation5 + $0x260] sm:$0xff]
    %v213 = vld [vmem:[#allocation5 + $0x268] sm:$0xff]
    %v214 = vld [vmem:[#allocation5 + $0x270] sm:$0xff]
    %v215 = vld [vmem:[#allocation5 + $0x278] sm:$0xff]
    %v216 = vld [vmem:[#allocation5 + $0x280] sm:$0xff]
    %v217 = vld [vmem:[#allocation5 + $0x288] sm:$0xff]
    %v218 = vld [vmem:[#allocation5 + $0x290] sm:$0xff]
    %v219 = vld [vmem:[#allocation5 + $0x298] sm:$0xff]
    %v220 = vld [vmem:[#allocation5 + $0x2a0] sm:$0xff]
    %v221 = vld [vmem:[#allocation5 + $0x2a8] sm:$0xff]
    %v222 = vld [vmem:[#allocation5 + $0x2b0] sm:$0xff]
    %v223 = vld [vmem:[#allocation5 + $0x2b8] sm:$0xff]
    %v224 = vld [vmem:[#allocation5 + $0x2c0] sm:$0xff]
    %v225 = vld [vmem:[#allocation5 + $0x2c8] sm:$0xff]
    %v226 = vld [vmem:[#allocation5 + $0x2d0] sm:$0xff]
    %v227 = vld [vmem:[#allocation5 + $0x2d8] sm:$0xff]
    %v228 = vld [vmem:[#allocation5 + $0x2e0] sm:$0xff]
    %v229 = vld [vmem:[#allocation5 + $0x2e8] sm:$0xff]
    %v230 = vld [vmem:[#allocation5 + $0x2f0] sm:$0xff]
    %v231 = vld [vmem:[#allocation5 + $0x2f8] sm:$0xff]
    %v232 = vld [vmem:[#allocation5 + $0x300] sm:$0xff]
    %v233 = vld [vmem:[#allocation5 + $0x308] sm:$0xff]
    %v234 = vld [vmem:[#allocation5 + $0x310] sm:$0xff]
    %v235 = vld [vmem:[#allocation5 + $0x318] sm:$0xff]
    %v236 = vld [vmem:[#allocation5 + $0x320] sm:$0xff]
    %v237 = vld [vmem:[#allocation5 + $0x328] sm:$0xff]
    %v238 = vld [vmem:[#allocation5 + $0x330] sm:$0xff]
    %v239 = vld [vmem:[#allocation5 + $0x338] sm:$0xff]
    %v240 = vld [vmem:[#allocation5 + $0x340] sm:$0xff]
    %v241 = vld [vmem:[#allocation5 + $0x348] sm:$0xff]
    %v242 = vld [vmem:[#allocation5 + $0x350] sm:$0xff]
    %v243 = vld [vmem:[#allocation5 + $0x358] sm:$0xff]
    %v244 = vld [vmem:[#allocation5 + $0x360] sm:$0xff]
    %v245 = vld [vmem:[#allocation5 + $0x368] sm:$0xff]
    %v246 = vld [vmem:[#allocation5 + $0x370] sm:$0xff]
    %v247 = vld [vmem:[#allocation5 + $0x378] sm:$0xff]
    %v248 = vld [vmem:[#allocation5 + $0x380] sm:$0xff]
    %v249 = vld [vmem:[#allocation5 + $0x388] sm:$0xff]
    %v250 = vld [vmem:[#allocation5 + $0x390] sm:$0xff]
    %v251 = vld [vmem:[#allocation5 + $0x398] sm:$0xff]
    %v252 = vld [vmem:[#allocation5 + $0x3a0] sm:$0xff]
    %v253 = vld [vmem:[#allocation5 + $0x3a8] sm:$0xff]
    %v254 = vld [vmem:[#allocation5 + $0x3b0] sm:$0xff]
    %v255 = vld [vmem:[#allocation5 + $0x3b8] sm:$0xff]
    %v256 = vld [vmem:[#allocation5 + $0x3c0] sm:$0xff]
    %v257 = vld [vmem:[#allocation5 + $0x3c8] sm:$0xff]
    %v258 = vld [vmem:[#allocation5 + $0x3d0] sm:$0xff]
    %v259 = vld [vmem:[#allocation5 + $0x3d8] sm:$0xff]
    %v260 = vld [vmem:[#allocation5 + $0x3e0] sm:$0xff]
    %v261 = vld [vmem:[#allocation5 + $0x3e8] sm:$0xff]
    %v262 = vld [vmem:[#allocation5 + $0x3f0] sm:$0xff]
    %v263 = vld [vmem:[#allocation5 + $0x3f8] sm:$0xff]
    %v264 = vld [vmem:[#allocation5 + $0x400] sm:$0xff]
    %v265 = vld [vmem:[#allocation5 + $0x408] sm:$0xff]
    %v266 = vld [vmem:[#allocation5 + $0x410] sm:$0xff]
    %v267 = vld [vmem:[#allocation5 + $0x418] sm:$0xff]
    %v268 = vld [vmem:[#allocation5 + $0x420] sm:$0xff]
    %v269 = vld [vmem:[#allocation5 + $0x428] sm:$0xff]
    %v270 = vld [vmem:[#allocation5 + $0x430] sm:$0xff]
    %v271 = vld [vmem:[#allocation5 + $0x438] sm:$0xff]
    %v272 = vld [vmem:[#allocation5 + $0x440] sm:$0xff]
    %v273 = vld [vmem:[#allocation5 + $0x448] sm:$0xff]
    %v274 = vld [vmem:[#allocation5 + $0x450] sm:$0xff]
    %v275 = vld [vmem:[#allocation5 + $0x458] sm:$0xff]
    %v276 = vld [vmem:[#allocation5 + $0x460] sm:$0xff]
    %v277 = vld [vmem:[#allocation5 + $0x468] sm:$0xff]
    %v278 = vld [vmem:[#allocation5 + $0x470] sm:$0xff]
    %v279 = vld [vmem:[#allocation5 + $0x478] sm:$0xff]
    %v280 = vld [vmem:[#allocation5 + $0x480] sm:$0xff]
    %v281 = vld [vmem:[#allocation5 + $0x488] sm:$0xff]
    %v282 = vld [vmem:[#allocation5 + $0x490] sm:$0xff]
    %v283 = vld [vmem:[#allocation5 + $0x498] sm:$0xff]
    %v284 = vld [vmem:[#allocation5 + $0x4a0] sm:$0xff]
    %v285 = vld [vmem:[#allocation5 + $0x4a8] sm:$0xff]
    %v286 = vld [vmem:[#allocation5 + $0x4b0] sm:$0xff]
    %v287 = vld [vmem:[#allocation5 + $0x4b8] sm:$0xff]
    %v288 = vld [vmem:[#allocation5 + $0x4c0] sm:$0xff]
    %v289 = vld [vmem:[#allocation5 + $0x4c8] sm:$0xff]
    %v290 = vld [vmem:[#allocation5 + $0x4d0] sm:$0xff]
    %v291 = vld [vmem:[#allocation5 + $0x4d8] sm:$0xff]
    %v292 = vld [vmem:[#allocation5 + $0x4e0] sm:$0xff]
    %v293 = vld [vmem:[#allocation5 + $0x4e8] sm:$0xff]
    %v294 = vld [vmem:[#allocation5 + $0x4f0] sm:$0xff]
    %v295 = vld [vmem:[#allocation5 + $0x4f8] sm:$0xff]
    %v296 = vld [vmem:[#allocation5 + $0x500] sm:$0xff]
    %v297 = vld [vmem:[#allocation5 + $0x508] sm:$0xff]
    %v298 = vld [vmem:[#allocation5 + $0x510] sm:$0xff]
    %v299 = vld [vmem:[#allocation5 + $0x518] sm:$0xff]
    %v300 = vld [vmem:[#allocation5 + $0x520] sm:$0xff]
    %v301 = vld [vmem:[#allocation5 + $0x528] sm:$0xff]
    %v302 = vld [vmem:[#allocation5 + $0x530] sm:$0xff]
    %v303 = vld [vmem:[#allocation5 + $0x538] sm:$0xff]
    %v304 = vld [vmem:[#allocation5 + $0x540] sm:$0xff]
    %v305 = vld [vmem:[#allocation5 + $0x548] sm:$0xff]
    %v306 = vld [vmem:[#allocation5 + $0x550] sm:$0xff]
    %v307 = vld [vmem:[#allocation5 + $0x558] sm:$0xff]
    %v308 = vld [vmem:[#allocation5 + $0x560] sm:$0xff]
    %v309 = vld [vmem:[#allocation5 + $0x568] sm:$0xff]
    %v310 = vld [vmem:[#allocation5 + $0x570] sm:$0xff]
    %v311 = vld [vmem:[#allocation5 + $0x578] sm:$0xff]
    %v312 = vld [vmem:[#allocation5 + $0x580] sm:$0xff]
    %v313 = vld [vmem:[#allocation5 + $0x588] sm:$0xff]
    %v314 = vld [vmem:[#allocation5 + $0x590] sm:$0xff]
    %v315 = vld [vmem:[#allocation5 + $0x598] sm:$0xff]
    %v316 = vld [vmem:[#allocation5 + $0x5a0] sm:$0xff]
    %v317 = vld [vmem:[#allocation5 + $0x5a8] sm:$0xff]
    %v318 = vld [vmem:[#allocation5 + $0x5b0] sm:$0xff]
    %v319 = vld [vmem:[#allocation5 + $0x5b8] sm:$0xff]
    %v320 = vld [vmem:[#allocation5 + $0x5c0] sm:$0xff]
    %v321 = vld [vmem:[#allocation5 + $0x5c8] sm:$0xff]
    %v322 = vld [vmem:[#allocation5 + $0x5d0] sm:$0xff]
    %v323 = vld [vmem:[#allocation5 + $0x5d8] sm:$0xff]
    %v324 = vld [vmem:[#allocation5 + $0x5e0] sm:$0xff]
    %v325 = vld [vmem:[#allocation5 + $0x5e8] sm:$0xff]
    %v326 = vld [vmem:[#allocation5 + $0x5f0] sm:$0xff]
    %v327 = vld [vmem:[#allocation5 + $0x5f8] sm:$0xff]
    %v328 = vld [vmem:[#allocation5 + $0x600] sm:$0xff]
    %v329 = vld [vmem:[#allocation5 + $0x608] sm:$0xff]
    %v330 = vld [vmem:[#allocation5 + $0x610] sm:$0xff]
    %v331 = vld [vmem:[#allocation5 + $0x618] sm:$0xff]
    %v332 = vld [vmem:[#allocation5 + $0x620] sm:$0xff]
    %v333 = vld [vmem:[#allocation5 + $0x628] sm:$0xff]
    %v334 = vld [vmem:[#allocation5 + $0x630] sm:$0xff]
    %v335 = vld [vmem:[#allocation5 + $0x638] sm:$0xff]
    %v336 = vld [vmem:[#allocation5 + $0x640] sm:$0xff]
    %v337 = vld [vmem:[#allocation5 + $0x648] sm:$0xff]
    %v338 = vld [vmem:[#allocation5 + $0x650] sm:$0xff]
    %v339 = vld [vmem:[#allocation5 + $0x658] sm:$0xff]
    %v340 = vld [vmem:[#allocation5 + $0x660] sm:$0xff]
    %v341 = vld [vmem:[#allocation5 + $0x668] sm:$0xff]
    %v342 = vld [vmem:[#allocation5 + $0x670] sm:$0xff]
    %v343 = vld [vmem:[#allocation5 + $0x678] sm:$0xff]
    %v344 = vld [vmem:[#allocation5 + $0x680] sm:$0xff]
    %v345 = vld [vmem:[#allocation5 + $0x688] sm:$0xff]
    %v346 = vld [vmem:[#allocation5 + $0x690] sm:$0xff]
    %v347 = vld [vmem:[#allocation5 + $0x698] sm:$0xff]
    %v348 = vld [vmem:[#allocation5 + $0x6a0] sm:$0xff]
    %v349 = vld [vmem:[#allocation5 + $0x6a8] sm:$0xff]
    %v350 = vld [vmem:[#allocation5 + $0x6b0] sm:$0xff]
    %v351 = vld [vmem:[#allocation5 + $0x6b8] sm:$0xff]
    %v352 = vld [vmem:[#allocation5 + $0x6c0] sm:$0xff]
    %v353 = vld [vmem:[#allocation5 + $0x6c8] sm:$0xff]
    %v354 = vld [vmem:[#allocation5 + $0x6d0] sm:$0xff]
    %v355 = vld [vmem:[#allocation5 + $0x6d8] sm:$0xff]
    %v356 = vld [vmem:[#allocation5 + $0x6e0] sm:$0xff]
    %v357 = vld [vmem:[#allocation5 + $0x6e8] sm:$0xff]
    %v358 = vld [vmem:[#allocation5 + $0x6f0] sm:$0xff]
    %v359 = vld [vmem:[#allocation5 + $0x6f8] sm:$0xff]
    %v360 = vld [vmem:[#allocation5 + $0x700] sm:$0xff]
    %v361 = vld [vmem:[#allocation5 + $0x708] sm:$0xff]
    %v362 = vld [vmem:[#allocation5 + $0x710] sm:$0xff]
    %v363 = vld [vmem:[#allocation5 + $0x718] sm:$0xff]
    %v364 = vld [vmem:[#allocation5 + $0x720] sm:$0xff]
    %v365 = vld [vmem:[#allocation5 + $0x728] sm:$0xff]
    %v366 = vld [vmem:[#allocation5 + $0x730] sm:$0xff]
    %v367 = vld [vmem:[#allocation5 + $0x738] sm:$0xff]
    %v368 = vld [vmem:[#allocation5 + $0x740] sm:$0xff]
    %v369 = vld [vmem:[#allocation5 + $0x748] sm:$0xff]
    %v370 = vld [vmem:[#allocation5 + $0x750] sm:$0xff]
    %v371 = vld [vmem:[#allocation5 + $0x758] sm:$0xff]
    %v372 = vld [vmem:[#allocation5 + $0x760] sm:$0xff]
    %v373 = vld [vmem:[#allocation5 + $0x768] sm:$0xff]
    %v374 = vld [vmem:[#allocation5 + $0x770] sm:$0xff]
    %v375 = vld [vmem:[#allocation5 + $0x778] sm:$0xff]
    %v376 = vld [vmem:[#allocation5 + $0x780] sm:$0xff]
    %v377 = vld [vmem:[#allocation5 + $0x788] sm:$0xff]
    %v378 = vld [vmem:[#allocation5 + $0x790] sm:$0xff]
    %v379 = vld [vmem:[#allocation5 + $0x798] sm:$0xff]
    %v380 = vld [vmem:[#allocation5 + $0x7a0] sm:$0xff]
    %v381 = vld [vmem:[#allocation5 + $0x7a8] sm:$0xff]
    %v382 = vld [vmem:[#allocation5 + $0x7b0] sm:$0xff]
    %v383 = vld [vmem:[#allocation5 + $0x7b8] sm:$0xff]
    %v384 = vld [vmem:[#allocation5 + $0x7c0] sm:$0xff]
    %v385 = vld [vmem:[#allocation5 + $0x7c8] sm:$0xff]
    %v386 = vld [vmem:[#allocation5 + $0x7d0] sm:$0xff]
    %v387 = vld [vmem:[#allocation5 + $0x7d8] sm:$0xff]
    %v388 = vld [vmem:[#allocation5 + $0x7e0] sm:$0xff]
    %v389 = vld [vmem:[#allocation5 + $0x7e8] sm:$0xff]
    %v390 = vld [vmem:[#allocation5 + $0x7f0] sm:$0xff]
    %v391 = vld [vmem:[#allocation5 + $0x7f8] sm:$0xff]
    %v392 = vld [vmem:[#allocation7] sm:$0xf]
    %v393 = vld [vmem:[%s3] sm:$0xf]
    %v394 = vld [vmem:[#allocation8] sm:$0xf]
    %v395 = vld [vmem:[#allocation8 + $0x4] sm:$0xf]
    %v396 = vld [vmem:[#allocation8 + $0x8] sm:$0xf]
    %v397 = vld [vmem:[#allocation8 + $0xc] sm:$0xf]
    %v398 = vld [vmem:[#allocation8 + $0x10] sm:$0xf]
    %v399 = vld [vmem:[#allocation8 + $0x14] sm:$0xf]
    %v400 = vld [vmem:[#allocation8 + $0x18] sm:$0xf]
    %v401 = vld [vmem:[#allocation8 + $0x1c] sm:$0xf]
    %v402 = vld [vmem:[#allocation8 + $0x20] sm:$0xf]
    %v403 = vld [vmem:[#allocation8 + $0x24] sm:$0xf]
    %v404 = vld [vmem:[#allocation8 + $0x28] sm:$0xf]
    %v405 = vld [vmem:[#allocation8 + $0x2c] sm:$0xf]
    %v406 = vld [vmem:[#allocation8 + $0x30] sm:$0xf]
    %v407 = vld [vmem:[#allocation8 + $0x34] sm:$0xf]
    %v408 = vld [vmem:[#allocation8 + $0x38] sm:$0xf]
    %v409 = vld [vmem:[#allocation8 + $0x3c] sm:$0xf]
    %v410 = vld [vmem:[#allocation8 + $0x40] sm:$0xf]
    %v411 = vld [vmem:[#allocation8 + $0x44] sm:$0xf]
    %v412 = vld [vmem:[#allocation8 + $0x48] sm:$0xf]
    %v413 = vld [vmem:[#allocation8 + $0x4c] sm:$0xf]
    %v414 = vld [vmem:[#allocation8 + $0x50] sm:$0xf]
    %v415 = vld [vmem:[#allocation8 + $0x54] sm:$0xf]
    %v416 = vld [vmem:[#allocation8 + $0x58] sm:$0xf]
    %v417 = vld [vmem:[#allocation8 + $0x5c] sm:$0xf]
    %v418 = vld [vmem:[#allocation8 + $0x60] sm:$0xf]
    %v419 = vld [vmem:[#allocation8 + $0x64] sm:$0xf]
    %v420 = vld [vmem:[#allocation8 + $0x68] sm:$0xf]
    %v421 = vld [vmem:[#allocation8 + $0x6c] sm:$0xf]
    %v422 = vld [vmem:[#allocation8 + $0x70] sm:$0xf]
    %v423 = vld [vmem:[#allocation8 + $0x74] sm:$0xf]
    %v424 = vld [vmem:[#allocation8 + $0x78] sm:$0xf]
    %v425 = vld [vmem:[#allocation8 + $0x7c] sm:$0xf]
    %v426 = vld [vmem:[#allocation8 + $0x80] sm:$0xf]
    %v427 = vld [vmem:[#allocation8 + $0x84] sm:$0xf]
    %v428 = vld [vmem:[#allocation8 + $0x88] sm:$0xf]
    %v429 = vld [vmem:[#allocation8 + $0x8c] sm:$0xf]
    %v430 = vld [vmem:[#allocation8 + $0x90] sm:$0xf]
    %v431 = vld [vmem:[#allocation8 + $0x94] sm:$0xf]
    %v432 = vld [vmem:[#allocation8 + $0x98] sm:$0xf]
    %v433 = vld [vmem:[#allocation8 + $0x9c] sm:$0xf]
    %v434 = vld [vmem:[#allocation8 + $0xa0] sm:$0xf]
    %v435 = vld [vmem:[#allocation8 + $0xa4] sm:$0xf]
    %v436 = vld [vmem:[#allocation8 + $0xa8] sm:$0xf]
    %v437 = vld [vmem:[#allocation8 + $0xac] sm:$0xf]
    %v438 = vld [vmem:[#allocation8 + $0xb0] sm:$0xf]
    %v439 = vld [vmem:[#allocation8 + $0xb4] sm:$0xf]
    %v440 = vld [vmem:[#allocation8 + $0xb8] sm:$0xf]
    %v441 = vld [vmem:[#allocation8 + $0xbc] sm:$0xf]
    %v442 = vld [vmem:[#allocation8 + $0xc0] sm:$0xf]
    %v443 = vld [vmem:[#allocation8 + $0xc4] sm:$0xf]
    %v444 = vld [vmem:[#allocation8 + $0xc8] sm:$0xf]
    %v445 = vld [vmem:[#allocation8 + $0xcc] sm:$0xf]
    %v446 = vld [vmem:[#allocation8 + $0xd0] sm:$0xf]
    %v447 = vld [vmem:[#allocation8 + $0xd4] sm:$0xf]
    %v448 = vld [vmem:[#allocation8 + $0xd8] sm:$0xf]
    %v449 = vld [vmem:[#allocation8 + $0xdc] sm:$0xf]
    %v450 = vld [vmem:[#allocation8 + $0xe0] sm:$0xf]
    %v451 = vld [vmem:[#allocation8 + $0xe4] sm:$0xf]
    %v452 = vld [vmem:[#allocation8 + $0xe8] sm:$0xf]
    %v453 = vld [vmem:[#allocation8 + $0xec] sm:$0xf]
    %v454 = vld [vmem:[#allocation8 + $0xf0] sm:$0xf]
    %v455 = vld [vmem:[#allocation8 + $0xf4] sm:$0xf]
    %v456 = vld [vmem:[#allocation8 + $0xf8] sm:$0xf]
    %v457 = vld [vmem:[#allocation8 + $0xfc] sm:$0xf]
    %v458 = vld [vmem:[%s5] sm:$0x1]
    %v459 = vunpack.c.l.s8.bf16 %v136
    %v460 = vunpack.c.l.s8.bf16 %v137
    %v461 = vunpack.c.l.s8.bf16 %v138
    %v462 = vunpack.c.l.s8.bf16 %v139
    %v463 = vunpack.c.h.s8.bf16 %v136
    %v464 = vunpack.c.h.s8.bf16 %v137
    %v465 = vunpack.c.h.s8.bf16 %v138
    %v466 = vunpack.c.h.s8.bf16 %v139
    %v467 = vunpack.c.l.s8.bf16 %v140
    %v468 = vunpack.c.l.s8.bf16 %v141
    %v469 = vunpack.c.l.s8.bf16 %v142
    %v470 = vunpack.c.l.s8.bf16 %v143
    %v471 = vunpack.c.h.s8.bf16 %v140
    %v472 = vunpack.c.h.s8.bf16 %v141
    %v473 = vunpack.c.h.s8.bf16 %v142
    %v474 = vunpack.c.h.s8.bf16 %v143
    %v475 = vunpack.c.l.s8.bf16 %v144
    %v476 = vunpack.c.l.s8.bf16 %v145
    %v477 = vunpack.c.l.s8.bf16 %v146
    %v478 = vunpack.c.l.s8.bf16 %v147
    %v479 = vunpack.c.h.s8.bf16 %v144
    %v480 = vunpack.c.h.s8.bf16 %v145
    %v481 = vunpack.c.h.s8.bf16 %v146
    %v482 = vunpack.c.h.s8.bf16 %v147
    %v483 = vunpack.c.l.s8.bf16 %v148
    %v484 = vunpack.c.l.s8.bf16 %v149
    %v485 = vunpack.c.l.s8.bf16 %v150
    %v486 = vunpack.c.l.s8.bf16 %v151
    %v487 = vunpack.c.h.s8.bf16 %v148
    %v488 = vunpack.c.h.s8.bf16 %v149
    %v489 = vunpack.c.h.s8.bf16 %v150
    %v490 = vunpack.c.h.s8.bf16 %v151
    %v491 = vunpack.c.l.s8.bf16 %v152
    %v492 = vunpack.c.l.s8.bf16 %v153
    %v493 = vunpack.c.l.s8.bf16 %v154
    %v494 = vunpack.c.l.s8.bf16 %v155
    %v495 = vunpack.c.h.s8.bf16 %v152
    %v496 = vunpack.c.h.s8.bf16 %v153
    %v497 = vunpack.c.h.s8.bf16 %v154
    %v498 = vunpack.c.h.s8.bf16 %v155
    %v499 = vunpack.c.l.s8.bf16 %v156
    %v500 = vunpack.c.l.s8.bf16 %v157
    %v501 = vunpack.c.l.s8.bf16 %v158
    %v502 = vunpack.c.l.s8.bf16 %v159
    %v503 = vunpack.c.h.s8.bf16 %v156
    %v504 = vunpack.c.h.s8.bf16 %v157
    %v505 = vunpack.c.h.s8.bf16 %v158
    %v506 = vunpack.c.h.s8.bf16 %v159
    %v507 = vunpack.c.l.s8.bf16 %v160
    %v508 = vunpack.c.l.s8.bf16 %v161
    %v509 = vunpack.c.l.s8.bf16 %v162
    %v510 = vunpack.c.l.s8.bf16 %v163
    %v511 = vunpack.c.h.s8.bf16 %v160
    %v512 = vunpack.c.h.s8.bf16 %v161
    %v513 = vunpack.c.h.s8.bf16 %v162
    %v514 = vunpack.c.h.s8.bf16 %v163
    %v515 = vunpack.c.l.s8.bf16 %v164
    %v516 = vunpack.c.l.s8.bf16 %v165
    %v517 = vunpack.c.l.s8.bf16 %v166
    %v518 = vunpack.c.l.s8.bf16 %v167
    %v519 = vunpack.c.h.s8.bf16 %v164
    %v520 = vunpack.c.h.s8.bf16 %v165
    %v521 = vunpack.c.h.s8.bf16 %v166
    %v522 = vunpack.c.h.s8.bf16 %v167
    %v523 = vunpack.c.l.s8.bf16 %v168
    %v524 = vunpack.c.l.s8.bf16 %v169
    %v525 = vunpack.c.l.s8.bf16 %v170
    %v526 = vunpack.c.l.s8.bf16 %v171
    %v527 = vunpack.c.h.s8.bf16 %v168
    %v528 = vunpack.c.h.s8.bf16 %v169
    %v529 = vunpack.c.h.s8.bf16 %v170
    %v530 = vunpack.c.h.s8.bf16 %v171
    %v531 = vunpack.c.l.s8.bf16 %v172
    %v532 = vunpack.c.l.s8.bf16 %v173
    %v533 = vunpack.c.l.s8.bf16 %v174
    %v534 = vunpack.c.l.s8.bf16 %v175
    %v535 = vunpack.c.h.s8.bf16 %v172
    %v536 = vunpack.c.h.s8.bf16 %v173
    %v537 = vunpack.c.h.s8.bf16 %v174
    %v538 = vunpack.c.h.s8.bf16 %v175
    %v539 = vunpack.c.l.s8.bf16 %v176
    %v540 = vunpack.c.l.s8.bf16 %v177
    %v541 = vunpack.c.l.s8.bf16 %v178
    %v542 = vunpack.c.l.s8.bf16 %v179
    %v543 = vunpack.c.h.s8.bf16 %v176
    %v544 = vunpack.c.h.s8.bf16 %v177
    %v545 = vunpack.c.h.s8.bf16 %v178
    %v546 = vunpack.c.h.s8.bf16 %v179
    %v547 = vunpack.c.l.s8.bf16 %v180
    %v548 = vunpack.c.l.s8.bf16 %v181
    %v549 = vunpack.c.l.s8.bf16 %v182
    %v550 = vunpack.c.l.s8.bf16 %v183
    %v551 = vunpack.c.h.s8.bf16 %v180
    %v552 = vunpack.c.h.s8.bf16 %v181
    %v553 = vunpack.c.h.s8.bf16 %v182
    %v554 = vunpack.c.h.s8.bf16 %v183
    %v555 = vunpack.c.l.s8.bf16 %v184
    %v556 = vunpack.c.l.s8.bf16 %v185
    %v557 = vunpack.c.l.s8.bf16 %v186
    %v558 = vunpack.c.l.s8.bf16 %v187
    %v559 = vunpack.c.h.s8.bf16 %v184
    %v560 = vunpack.c.h.s8.bf16 %v185
    %v561 = vunpack.c.h.s8.bf16 %v186
    %v562 = vunpack.c.h.s8.bf16 %v187
    %v563 = vunpack.c.l.s8.bf16 %v188
    %v564 = vunpack.c.l.s8.bf16 %v189
    %v565 = vunpack.c.l.s8.bf16 %v190
    %v566 = vunpack.c.l.s8.bf16 %v191
    %v567 = vunpack.c.h.s8.bf16 %v188
    %v568 = vunpack.c.h.s8.bf16 %v189
    %v569 = vunpack.c.h.s8.bf16 %v190
    %v570 = vunpack.c.h.s8.bf16 %v191
    %v571 = vunpack.c.l.s8.bf16 %v192
    %v572 = vunpack.c.l.s8.bf16 %v193
    %v573 = vunpack.c.l.s8.bf16 %v194
    %v574 = vunpack.c.l.s8.bf16 %v195
    %v575 = vunpack.c.h.s8.bf16 %v192
    %v576 = vunpack.c.h.s8.bf16 %v193
    %v577 = vunpack.c.h.s8.bf16 %v194
    %v578 = vunpack.c.h.s8.bf16 %v195
    %v579 = vunpack.c.l.s8.bf16 %v196
    %v580 = vunpack.c.l.s8.bf16 %v197
    %v581 = vunpack.c.l.s8.bf16 %v198
    %v582 = vunpack.c.l.s8.bf16 %v199
    %v583 = vunpack.c.h.s8.bf16 %v196
    %v584 = vunpack.c.h.s8.bf16 %v197
    %v585 = vunpack.c.h.s8.bf16 %v198
    %v586 = vunpack.c.h.s8.bf16 %v199
    %v587 = vunpack.c.l.s8.bf16 %v200
    %v588 = vunpack.c.l.s8.bf16 %v201
    %v589 = vunpack.c.l.s8.bf16 %v202
    %v590 = vunpack.c.l.s8.bf16 %v203
    %v591 = vunpack.c.h.s8.bf16 %v200
    %v592 = vunpack.c.h.s8.bf16 %v201
    %v593 = vunpack.c.h.s8.bf16 %v202
    %v594 = vunpack.c.h.s8.bf16 %v203
    %v595 = vunpack.c.l.s8.bf16 %v204
    %v596 = vunpack.c.l.s8.bf16 %v205
    %v597 = vunpack.c.l.s8.bf16 %v206
    %v598 = vunpack.c.l.s8.bf16 %v207
    %v599 = vunpack.c.h.s8.bf16 %v204
    %v600 = vunpack.c.h.s8.bf16 %v205
    %v601 = vunpack.c.h.s8.bf16 %v206
    %v602 = vunpack.c.h.s8.bf16 %v207
    %v603 = vunpack.c.l.s8.bf16 %v208
    %v604 = vunpack.c.l.s8.bf16 %v209
    %v605 = vunpack.c.l.s8.bf16 %v210
    %v606 = vunpack.c.l.s8.bf16 %v211
    %v607 = vunpack.c.h.s8.bf16 %v208
    %v608 = vunpack.c.h.s8.bf16 %v209
    %v609 = vunpack.c.h.s8.bf16 %v210
    %v610 = vunpack.c.h.s8.bf16 %v211
    %v611 = vunpack.c.l.s8.bf16 %v212
    %v612 = vunpack.c.l.s8.bf16 %v213
    %v613 = vunpack.c.l.s8.bf16 %v214
    %v614 = vunpack.c.l.s8.bf16 %v215
    %v615 = vunpack.c.h.s8.bf16 %v212
    %v616 = vunpack.c.h.s8.bf16 %v213
    %v617 = vunpack.c.h.s8.bf16 %v214
    %v618 = vunpack.c.h.s8.bf16 %v215
    %v619 = vunpack.c.l.s8.bf16 %v216
    %v620 = vunpack.c.l.s8.bf16 %v217
    %v621 = vunpack.c.l.s8.bf16 %v218
    %v622 = vunpack.c.l.s8.bf16 %v219
    %v623 = vunpack.c.h.s8.bf16 %v216
    %v624 = vunpack.c.h.s8.bf16 %v217
    %v625 = vunpack.c.h.s8.bf16 %v218
    %v626 = vunpack.c.h.s8.bf16 %v219
    %v627 = vunpack.c.l.s8.bf16 %v220
    %v628 = vunpack.c.l.s8.bf16 %v221
    %v629 = vunpack.c.l.s8.bf16 %v222
    %v630 = vunpack.c.l.s8.bf16 %v223
    %v631 = vunpack.c.h.s8.bf16 %v220
    %v632 = vunpack.c.h.s8.bf16 %v221
    %v633 = vunpack.c.h.s8.bf16 %v222
    %v634 = vunpack.c.h.s8.bf16 %v223
    %v635 = vunpack.c.l.s8.bf16 %v224
    %v636 = vunpack.c.l.s8.bf16 %v225
    %v637 = vunpack.c.l.s8.bf16 %v226
    %v638 = vunpack.c.l.s8.bf16 %v227
    %v639 = vunpack.c.h.s8.bf16 %v224
    %v640 = vunpack.c.h.s8.bf16 %v225
    %v641 = vunpack.c.h.s8.bf16 %v226
    %v642 = vunpack.c.h.s8.bf16 %v227
    %v643 = vunpack.c.l.s8.bf16 %v228
    %v644 = vunpack.c.l.s8.bf16 %v229
    %v645 = vunpack.c.l.s8.bf16 %v230
    %v646 = vunpack.c.l.s8.bf16 %v231
    %v647 = vunpack.c.h.s8.bf16 %v228
    %v648 = vunpack.c.h.s8.bf16 %v229
    %v649 = vunpack.c.h.s8.bf16 %v230
    %v650 = vunpack.c.h.s8.bf16 %v231
    %v651 = vunpack.c.l.s8.bf16 %v232
    %v652 = vunpack.c.l.s8.bf16 %v233
    %v653 = vunpack.c.l.s8.bf16 %v234
    %v654 = vunpack.c.l.s8.bf16 %v235
    %v655 = vunpack.c.h.s8.bf16 %v232
    %v656 = vunpack.c.h.s8.bf16 %v233
    %v657 = vunpack.c.h.s8.bf16 %v234
    %v658 = vunpack.c.h.s8.bf16 %v235
    %v659 = vunpack.c.l.s8.bf16 %v236
    %v660 = vunpack.c.l.s8.bf16 %v237
    %v661 = vunpack.c.l.s8.bf16 %v238
    %v662 = vunpack.c.l.s8.bf16 %v239
    %v663 = vunpack.c.h.s8.bf16 %v236
    %v664 = vunpack.c.h.s8.bf16 %v237
    %v665 = vunpack.c.h.s8.bf16 %v238
    %v666 = vunpack.c.h.s8.bf16 %v239
    %v667 = vunpack.c.l.s8.bf16 %v240
    %v668 = vunpack.c.l.s8.bf16 %v241
    %v669 = vunpack.c.l.s8.bf16 %v242
    %v670 = vunpack.c.l.s8.bf16 %v243
    %v671 = vunpack.c.h.s8.bf16 %v240
    %v672 = vunpack.c.h.s8.bf16 %v241
    %v673 = vunpack.c.h.s8.bf16 %v242
    %v674 = vunpack.c.h.s8.bf16 %v243
    %v675 = vunpack.c.l.s8.bf16 %v244
    %v676 = vunpack.c.l.s8.bf16 %v245
    %v677 = vunpack.c.l.s8.bf16 %v246
    %v678 = vunpack.c.l.s8.bf16 %v247
    %v679 = vunpack.c.h.s8.bf16 %v244
    %v680 = vunpack.c.h.s8.bf16 %v245
    %v681 = vunpack.c.h.s8.bf16 %v246
    %v682 = vunpack.c.h.s8.bf16 %v247
    %v683 = vunpack.c.l.s8.bf16 %v248
    %v684 = vunpack.c.l.s8.bf16 %v249
    %v685 = vunpack.c.l.s8.bf16 %v250
    %v686 = vunpack.c.l.s8.bf16 %v251
    %v687 = vunpack.c.h.s8.bf16 %v248
    %v688 = vunpack.c.h.s8.bf16 %v249
    %v689 = vunpack.c.h.s8.bf16 %v250
    %v690 = vunpack.c.h.s8.bf16 %v251
    %v691 = vunpack.c.l.s8.bf16 %v252
    %v692 = vunpack.c.l.s8.bf16 %v253
    %v693 = vunpack.c.l.s8.bf16 %v254
    %v694 = vunpack.c.l.s8.bf16 %v255
    %v695 = vunpack.c.h.s8.bf16 %v252
    %v696 = vunpack.c.h.s8.bf16 %v253
    %v697 = vunpack.c.h.s8.bf16 %v254
    %v698 = vunpack.c.h.s8.bf16 %v255
    %v699 = vunpack.c.l.s8.bf16 %v256
    %v700 = vunpack.c.l.s8.bf16 %v257
    %v701 = vunpack.c.l.s8.bf16 %v258
    %v702 = vunpack.c.l.s8.bf16 %v259
    %v703 = vunpack.c.h.s8.bf16 %v256
    %v704 = vunpack.c.h.s8.bf16 %v257
    %v705 = vunpack.c.h.s8.bf16 %v258
    %v706 = vunpack.c.h.s8.bf16 %v259
    %v707 = vunpack.c.l.s8.bf16 %v260
    %v708 = vunpack.c.l.s8.bf16 %v261
    %v709 = vunpack.c.l.s8.bf16 %v262
    %v710 = vunpack.c.l.s8.bf16 %v263
    %v711 = vunpack.c.h.s8.bf16 %v260
    %v712 = vunpack.c.h.s8.bf16 %v261
    %v713 = vunpack.c.h.s8.bf16 %v262
    %v714 = vunpack.c.h.s8.bf16 %v263
    %v715 = vunpack.c.l.s8.bf16 %v264
    %v716 = vunpack.c.l.s8.bf16 %v265
    %v717 = vunpack.c.l.s8.bf16 %v266
    %v718 = vunpack.c.l.s8.bf16 %v267
    %v719 = vunpack.c.h.s8.bf16 %v264
    %v720 = vunpack.c.h.s8.bf16 %v265
    %v721 = vunpack.c.h.s8.bf16 %v266
    %v722 = vunpack.c.h.s8.bf16 %v267
    %v723 = vunpack.c.l.s8.bf16 %v268
    %v724 = vunpack.c.l.s8.bf16 %v269
    %v725 = vunpack.c.l.s8.bf16 %v270
    %v726 = vunpack.c.l.s8.bf16 %v271
    %v727 = vunpack.c.h.s8.bf16 %v268
    %v728 = vunpack.c.h.s8.bf16 %v269
    %v729 = vunpack.c.h.s8.bf16 %v270
    %v730 = vunpack.c.h.s8.bf16 %v271
    %v731 = vunpack.c.l.s8.bf16 %v272
    %v732 = vunpack.c.l.s8.bf16 %v273
    %v733 = vunpack.c.l.s8.bf16 %v274
    %v734 = vunpack.c.l.s8.bf16 %v275
    %v735 = vunpack.c.h.s8.bf16 %v272
    %v736 = vunpack.c.h.s8.bf16 %v273
    %v737 = vunpack.c.h.s8.bf16 %v274
    %v738 = vunpack.c.h.s8.bf16 %v275
    %v739 = vunpack.c.l.s8.bf16 %v276
    %v740 = vunpack.c.l.s8.bf16 %v277
    %v741 = vunpack.c.l.s8.bf16 %v278
    %v742 = vunpack.c.l.s8.bf16 %v279
    %v743 = vunpack.c.h.s8.bf16 %v276
    %v744 = vunpack.c.h.s8.bf16 %v277
    %v745 = vunpack.c.h.s8.bf16 %v278
    %v746 = vunpack.c.h.s8.bf16 %v279
    %v747 = vunpack.c.l.s8.bf16 %v280
    %v748 = vunpack.c.l.s8.bf16 %v281
    %v749 = vunpack.c.l.s8.bf16 %v282
    %v750 = vunpack.c.l.s8.bf16 %v283
    %v751 = vunpack.c.h.s8.bf16 %v280
    %v752 = vunpack.c.h.s8.bf16 %v281
    %v753 = vunpack.c.h.s8.bf16 %v282
    %v754 = vunpack.c.h.s8.bf16 %v283
    %v755 = vunpack.c.l.s8.bf16 %v284
    %v756 = vunpack.c.l.s8.bf16 %v285
    %v757 = vunpack.c.l.s8.bf16 %v286
    %v758 = vunpack.c.l.s8.bf16 %v287
    %v759 = vunpack.c.h.s8.bf16 %v284
    %v760 = vunpack.c.h.s8.bf16 %v285
    %v761 = vunpack.c.h.s8.bf16 %v286
    %v762 = vunpack.c.h.s8.bf16 %v287
    %v763 = vunpack.c.l.s8.bf16 %v288
    %v764 = vunpack.c.l.s8.bf16 %v289
    %v765 = vunpack.c.l.s8.bf16 %v290
    %v766 = vunpack.c.l.s8.bf16 %v291
    %v767 = vunpack.c.h.s8.bf16 %v288
    %v768 = vunpack.c.h.s8.bf16 %v289
    %v769 = vunpack.c.h.s8.bf16 %v290
    %v770 = vunpack.c.h.s8.bf16 %v291
    %v771 = vunpack.c.l.s8.bf16 %v292
    %v772 = vunpack.c.l.s8.bf16 %v293
    %v773 = vunpack.c.l.s8.bf16 %v294
    %v774 = vunpack.c.l.s8.bf16 %v295
    %v775 = vunpack.c.h.s8.bf16 %v292
    %v776 = vunpack.c.h.s8.bf16 %v293
    %v777 = vunpack.c.h.s8.bf16 %v294
    %v778 = vunpack.c.h.s8.bf16 %v295
    %v779 = vunpack.c.l.s8.bf16 %v296
    %v780 = vunpack.c.l.s8.bf16 %v297
    %v781 = vunpack.c.l.s8.bf16 %v298
    %v782 = vunpack.c.l.s8.bf16 %v299
    %v783 = vunpack.c.h.s8.bf16 %v296
    %v784 = vunpack.c.h.s8.bf16 %v297
    %v785 = vunpack.c.h.s8.bf16 %v298
    %v786 = vunpack.c.h.s8.bf16 %v299
    %v787 = vunpack.c.l.s8.bf16 %v300
    %v788 = vunpack.c.l.s8.bf16 %v301
    %v789 = vunpack.c.l.s8.bf16 %v302
    %v790 = vunpack.c.l.s8.bf16 %v303
    %v791 = vunpack.c.h.s8.bf16 %v300
    %v792 = vunpack.c.h.s8.bf16 %v301
    %v793 = vunpack.c.h.s8.bf16 %v302
    %v794 = vunpack.c.h.s8.bf16 %v303
    %v795 = vunpack.c.l.s8.bf16 %v304
    %v796 = vunpack.c.l.s8.bf16 %v305
    %v797 = vunpack.c.l.s8.bf16 %v306
    %v798 = vunpack.c.l.s8.bf16 %v307
    %v799 = vunpack.c.h.s8.bf16 %v304
    %v800 = vunpack.c.h.s8.bf16 %v305
    %v801 = vunpack.c.h.s8.bf16 %v306
    %v802 = vunpack.c.h.s8.bf16 %v307
    %v803 = vunpack.c.l.s8.bf16 %v308
    %v804 = vunpack.c.l.s8.bf16 %v309
    %v805 = vunpack.c.l.s8.bf16 %v310
    %v806 = vunpack.c.l.s8.bf16 %v311
    %v807 = vunpack.c.h.s8.bf16 %v308
    %v808 = vunpack.c.h.s8.bf16 %v309
    %v809 = vunpack.c.h.s8.bf16 %v310
    %v810 = vunpack.c.h.s8.bf16 %v311
    %v811 = vunpack.c.l.s8.bf16 %v312
    %v812 = vunpack.c.l.s8.bf16 %v313
    %v813 = vunpack.c.l.s8.bf16 %v314
    %v814 = vunpack.c.l.s8.bf16 %v315
    %v815 = vunpack.c.h.s8.bf16 %v312
    %v816 = vunpack.c.h.s8.bf16 %v313
    %v817 = vunpack.c.h.s8.bf16 %v314
    %v818 = vunpack.c.h.s8.bf16 %v315
    %v819 = vunpack.c.l.s8.bf16 %v316
    %v820 = vunpack.c.l.s8.bf16 %v317
    %v821 = vunpack.c.l.s8.bf16 %v318
    %v822 = vunpack.c.l.s8.bf16 %v319
    %v823 = vunpack.c.h.s8.bf16 %v316
    %v824 = vunpack.c.h.s8.bf16 %v317
    %v825 = vunpack.c.h.s8.bf16 %v318
    %v826 = vunpack.c.h.s8.bf16 %v319
    %v827 = vunpack.c.l.s8.bf16 %v320
    %v828 = vunpack.c.l.s8.bf16 %v321
    %v829 = vunpack.c.l.s8.bf16 %v322
    %v830 = vunpack.c.l.s8.bf16 %v323
    %v831 = vunpack.c.h.s8.bf16 %v320
    %v832 = vunpack.c.h.s8.bf16 %v321
    %v833 = vunpack.c.h.s8.bf16 %v322
    %v834 = vunpack.c.h.s8.bf16 %v323
    %v835 = vunpack.c.l.s8.bf16 %v324
    %v836 = vunpack.c.l.s8.bf16 %v325
    %v837 = vunpack.c.l.s8.bf16 %v326
    %v838 = vunpack.c.l.s8.bf16 %v327
    %v839 = vunpack.c.h.s8.bf16 %v324
    %v840 = vunpack.c.h.s8.bf16 %v325
    %v841 = vunpack.c.h.s8.bf16 %v326
    %v842 = vunpack.c.h.s8.bf16 %v327
    %v843 = vunpack.c.l.s8.bf16 %v328
    %v844 = vunpack.c.l.s8.bf16 %v329
    %v845 = vunpack.c.l.s8.bf16 %v330
    %v846 = vunpack.c.l.s8.bf16 %v331
    %v847 = vunpack.c.h.s8.bf16 %v328
    %v848 = vunpack.c.h.s8.bf16 %v329
    %v849 = vunpack.c.h.s8.bf16 %v330
    %v850 = vunpack.c.h.s8.bf16 %v331
    %v851 = vunpack.c.l.s8.bf16 %v332
    %v852 = vunpack.c.l.s8.bf16 %v333
    %v853 = vunpack.c.l.s8.bf16 %v334
    %v854 = vunpack.c.l.s8.bf16 %v335
    %v855 = vunpack.c.h.s8.bf16 %v332
    %v856 = vunpack.c.h.s8.bf16 %v333
    %v857 = vunpack.c.h.s8.bf16 %v334
    %v858 = vunpack.c.h.s8.bf16 %v335
    %v859 = vunpack.c.l.s8.bf16 %v336
    %v860 = vunpack.c.l.s8.bf16 %v337
    %v861 = vunpack.c.l.s8.bf16 %v338
    %v862 = vunpack.c.l.s8.bf16 %v339
    %v863 = vunpack.c.h.s8.bf16 %v336
    %v864 = vunpack.c.h.s8.bf16 %v337
    %v865 = vunpack.c.h.s8.bf16 %v338
    %v866 = vunpack.c.h.s8.bf16 %v339
    %v867 = vunpack.c.l.s8.bf16 %v340
    %v868 = vunpack.c.l.s8.bf16 %v341
    %v869 = vunpack.c.l.s8.bf16 %v342
    %v870 = vunpack.c.l.s8.bf16 %v343
    %v871 = vunpack.c.h.s8.bf16 %v340
    %v872 = vunpack.c.h.s8.bf16 %v341
    %v873 = vunpack.c.h.s8.bf16 %v342
    %v874 = vunpack.c.h.s8.bf16 %v343
    %v875 = vunpack.c.l.s8.bf16 %v344
    %v876 = vunpack.c.l.s8.bf16 %v345
    %v877 = vunpack.c.l.s8.bf16 %v346
    %v878 = vunpack.c.l.s8.bf16 %v347
    %v879 = vunpack.c.h.s8.bf16 %v344
    %v880 = vunpack.c.h.s8.bf16 %v345
    %v881 = vunpack.c.h.s8.bf16 %v346
    %v882 = vunpack.c.h.s8.bf16 %v347
    %v883 = vunpack.c.l.s8.bf16 %v348
    %v884 = vunpack.c.l.s8.bf16 %v349
    %v885 = vunpack.c.l.s8.bf16 %v350
    %v886 = vunpack.c.l.s8.bf16 %v351
    %v887 = vunpack.c.h.s8.bf16 %v348
    %v888 = vunpack.c.h.s8.bf16 %v349
    %v889 = vunpack.c.h.s8.bf16 %v350
    %v890 = vunpack.c.h.s8.bf16 %v351
    %v891 = vunpack.c.l.s8.bf16 %v352
    %v892 = vunpack.c.l.s8.bf16 %v353
    %v893 = vunpack.c.l.s8.bf16 %v354
    %v894 = vunpack.c.l.s8.bf16 %v355
    %v895 = vunpack.c.h.s8.bf16 %v352
    %v896 = vunpack.c.h.s8.bf16 %v353
    %v897 = vunpack.c.h.s8.bf16 %v354
    %v898 = vunpack.c.h.s8.bf16 %v355
    %v899 = vunpack.c.l.s8.bf16 %v356
    %v900 = vunpack.c.l.s8.bf16 %v357
    %v901 = vunpack.c.l.s8.bf16 %v358
    %v902 = vunpack.c.l.s8.bf16 %v359
    %v903 = vunpack.c.h.s8.bf16 %v356
    %v904 = vunpack.c.h.s8.bf16 %v357
    %v905 = vunpack.c.h.s8.bf16 %v358
    %v906 = vunpack.c.h.s8.bf16 %v359
    %v907 = vunpack.c.l.s8.bf16 %v360
    %v908 = vunpack.c.l.s8.bf16 %v361
    %v909 = vunpack.c.l.s8.bf16 %v362
    %v910 = vunpack.c.l.s8.bf16 %v363
    %v911 = vunpack.c.h.s8.bf16 %v360
    %v912 = vunpack.c.h.s8.bf16 %v361
    %v913 = vunpack.c.h.s8.bf16 %v362
    %v914 = vunpack.c.h.s8.bf16 %v363
    %v915 = vunpack.c.l.s8.bf16 %v364
    %v916 = vunpack.c.l.s8.bf16 %v365
    %v917 = vunpack.c.l.s8.bf16 %v366
    %v918 = vunpack.c.l.s8.bf16 %v367
    %v919 = vunpack.c.h.s8.bf16 %v364
    %v920 = vunpack.c.h.s8.bf16 %v365
    %v921 = vunpack.c.h.s8.bf16 %v366
    %v922 = vunpack.c.h.s8.bf16 %v367
    %v923 = vunpack.c.l.s8.bf16 %v368
    %v924 = vunpack.c.l.s8.bf16 %v369
    %v925 = vunpack.c.l.s8.bf16 %v370
    %v926 = vunpack.c.l.s8.bf16 %v371
    %v927 = vunpack.c.h.s8.bf16 %v368
    %v928 = vunpack.c.h.s8.bf16 %v369
    %v929 = vunpack.c.h.s8.bf16 %v370
    %v930 = vunpack.c.h.s8.bf16 %v371
    %v931 = vunpack.c.l.s8.bf16 %v372
    %v932 = vunpack.c.l.s8.bf16 %v373
    %v933 = vunpack.c.l.s8.bf16 %v374
    %v934 = vunpack.c.l.s8.bf16 %v375
    %v935 = vunpack.c.h.s8.bf16 %v372
    %v936 = vunpack.c.h.s8.bf16 %v373
    %v937 = vunpack.c.h.s8.bf16 %v374
    %v938 = vunpack.c.h.s8.bf16 %v375
    %v939 = vunpack.c.l.s8.bf16 %v376
    %v940 = vunpack.c.l.s8.bf16 %v377
    %v941 = vunpack.c.l.s8.bf16 %v378
    %v942 = vunpack.c.l.s8.bf16 %v379
    %v943 = vunpack.c.h.s8.bf16 %v376
    %v944 = vunpack.c.h.s8.bf16 %v377
    %v945 = vunpack.c.h.s8.bf16 %v378
    %v946 = vunpack.c.h.s8.bf16 %v379
    %v947 = vunpack.c.l.s8.bf16 %v380
    %v948 = vunpack.c.l.s8.bf16 %v381
    %v949 = vunpack.c.l.s8.bf16 %v382
    %v950 = vunpack.c.l.s8.bf16 %v383
    %v951 = vunpack.c.h.s8.bf16 %v380
    %v952 = vunpack.c.h.s8.bf16 %v381
    %v953 = vunpack.c.h.s8.bf16 %v382
    %v954 = vunpack.c.h.s8.bf16 %v383
    %v955 = vunpack.c.l.s8.bf16 %v384
    %v956 = vunpack.c.l.s8.bf16 %v385
    %v957 = vunpack.c.l.s8.bf16 %v386
    %v958 = vunpack.c.l.s8.bf16 %v387
    %v959 = vunpack.c.h.s8.bf16 %v384
    %v960 = vunpack.c.h.s8.bf16 %v385
    %v961 = vunpack.c.h.s8.bf16 %v386
    %v962 = vunpack.c.h.s8.bf16 %v387
    %v963 = vunpack.c.l.s8.bf16 %v388
    %v964 = vunpack.c.l.s8.bf16 %v389
    %v965 = vunpack.c.l.s8.bf16 %v390
    %v966 = vunpack.c.l.s8.bf16 %v391
    %v967 = vunpack.c.h.s8.bf16 %v388
    %v968 = vunpack.c.h.s8.bf16 %v389
    %v969 = vunpack.c.h.s8.bf16 %v390
    %v970 = vunpack.c.h.s8.bf16 %v391
    %v987 = vunpack.c.l.b16 %v120
    %v988 = vunpack.c.h.b16 %v120
    %v989 = vunpack.c.l.b16 %v121
    %v990 = vunpack.c.h.b16 %v121
    %v991 = vunpack.c.l.b16 %v122
    %v992 = vunpack.c.h.b16 %v122
    %v993 = vunpack.c.l.b16 %v123
    %v994 = vunpack.c.h.b16 %v123
    %v995 = vunpack.c.l.b16 %v124
    %v996 = vunpack.c.h.b16 %v124
    %v997 = vunpack.c.l.b16 %v125
    %v998 = vunpack.c.h.b16 %v125
    %v999 = vunpack.c.l.b16 %v126
    %v1000 = vunpack.c.h.b16 %v126
    %v1001 = vunpack.c.l.b16 %v127
    %v1002 = vunpack.c.h.b16 %v127
    %v1003 = vunpack.c.l.b16 %v128
    %v1004 = vunpack.c.h.b16 %v128
    %v1005 = vunpack.c.l.b16 %v129
    %v1006 = vunpack.c.h.b16 %v129
    %v1007 = vunpack.c.l.b16 %v130
    %v1008 = vunpack.c.h.b16 %v130
    %v1009 = vunpack.c.l.b16 %v131
    %v1010 = vunpack.c.h.b16 %v131
    %v1011 = vunpack.c.l.b16 %v132
    %v1012 = vunpack.c.h.b16 %v132
    %v1013 = vunpack.c.l.b16 %v133
    %v1014 = vunpack.c.h.b16 %v133
    %v1015 = vunpack.c.l.b16 %v134
    %v1016 = vunpack.c.h.b16 %v134
    %v1017 = vunpack.c.l.b16 %v135
    %v1018 = vunpack.c.h.b16 %v135
    %v1019 = vpack.c.b16 %v1003, %v987
    %v1020 = vpack.c.b16 %v1004, %v988
    %v1021 = vpack.c.b16 %v1005, %v989
    %v1022 = vpack.c.b16 %v1006, %v990
    %v1023 = vpack.c.b16 %v1007, %v991
    %v1024 = vpack.c.b16 %v1008, %v992
    %v1025 = vpack.c.b16 %v1009, %v993
    %v1026 = vpack.c.b16 %v1010, %v994
    %v1027 = vpack.c.b16 %v1011, %v995
    %v1028 = vpack.c.b16 %v1012, %v996
    %v1029 = vpack.c.b16 %v1013, %v997
    %v1030 = vpack.c.b16 %v1014, %v998
    %v1031 = vpack.c.b16 %v1015, %v999
    %v1032 = vpack.c.b16 %v1016, %v1000
    %v1033 = vpack.c.b16 %v1017, %v1001
    %v1034 = vpack.c.b16 %v1018, %v1002
    %1051 = vmatprep.subr.bf16.mxu0 %v488
    %1052 = vmatpush1.bf16.msra.mxu0 %v487
    %1053 = vmatprep.subr.bf16.mxu0 %v484
    %1054 = vmatpush1.bf16.msra.mxu0 %v483
    %1055 = vmatprep.subr.bf16.mxu0 %v480
    %1056 = vmatpush1.bf16.msra.mxu0 %v479
    %1057 = vmatprep.subr.bf16.mxu0 %v476
    %1058 = vmatpush1.bf16.msra.mxu0 %v475
    %1059 = vmatprep.subr.bf16.mxu0 %v472
    %1060 = vmatpush1.bf16.msra.mxu0 %v471
    %1061 = vmatprep.subr.bf16.mxu0 %v468
    %1062 = vmatpush1.bf16.msra.mxu0 %v467
    %1063 = vmatprep.subr.bf16.mxu0 %v464
    %1064 = vmatpush1.bf16.msra.mxu0 %v463
    %1065 = vmatprep.subr.bf16.mxu0 %v460
    %1066 = vmatpush1.bf16.msra.mxu0 %v459
    %1067 = vmatprep.subr.bf16.mxu0 %v520
    %1068 = vmatpush2.bf16.msra.mxu0 %v519
    %1069 = vmatprep.subr.bf16.mxu0 %v516
    %1070 = vmatpush2.bf16.msra.mxu0 %v515
    %1071 = vmatprep.subr.bf16.mxu0 %v512
    %1072 = vmatpush2.bf16.msra.mxu0 %v511
    %1073 = vmatprep.subr.bf16.mxu0 %v508
    %1074 = vmatpush2.bf16.msra.mxu0 %v507
    %1075 = vmatprep.subr.bf16.mxu0 %v504
    %1076 = vmatpush2.bf16.msra.mxu0 %v503
    %1077 = vmatprep.subr.bf16.mxu0 %v500
    %1078 = vmatpush2.bf16.msra.mxu0 %v499
    %1079 = vmatprep.subr.bf16.mxu0 %v496
    %1080 = vmatpush2.bf16.msra.mxu0 %v495
    %1081 = vmatprep.subr.bf16.mxu0 %v492
    %1082 = vmatpush2.bf16.msra.mxu0 %v491
    %1083 = vmatprep.mubr.bf16.mxu0 %v1020
    %1084 = vmatmul.mubr.bf16.gmra.mxu0 %v1019
    %v1085 = vpop.f32.mrf.mxu0
    %v1086 = vadd.f32 0.0, %v1085
    %v1087 = vpop.f32.mrf.mxu0
    %v1088 = vadd.f32 0.0, %v1087
    %v1089 = vpop.f32.mrf.mxu0
    %v1090 = vadd.f32 0.0, %v1089
    %v1091 = vpop.f32.mrf.mxu0
    %v1092 = vadd.f32 0.0, %v1091
    %1093 = vdwg.mxu0
    %1094 = vmatprep.subr.bf16.mxu0 %v552
    %1095 = vmatpush1.bf16.msra.mxu0 %v551
    %1096 = vmatprep.subr.bf16.mxu0 %v548
    %1097 = vmatpush1.bf16.msra.mxu0 %v547
    %1098 = vmatprep.subr.bf16.mxu0 %v544
    %1099 = vmatpush1.bf16.msra.mxu0 %v543
    %1100 = vmatprep.subr.bf16.mxu0 %v540
    %1101 = vmatpush1.bf16.msra.mxu0 %v539
    %1102 = vmatprep.subr.bf16.mxu0 %v536
    %1103 = vmatpush1.bf16.msra.mxu0 %v535
    %1104 = vmatprep.subr.bf16.mxu0 %v532
    %1105 = vmatpush1.bf16.msra.mxu0 %v531
    %1106 = vmatprep.subr.bf16.mxu0 %v528
    %1107 = vmatpush1.bf16.msra.mxu0 %v527
    %1108 = vmatprep.subr.bf16.mxu0 %v524
    %1109 = vmatpush1.bf16.msra.mxu0 %v523
    %1110 = vmatprep.subr.bf16.mxu0 %v584
    %1111 = vmatpush2.bf16.msra.mxu0 %v583
    %1112 = vmatprep.subr.bf16.mxu0 %v580
    %1113 = vmatpush2.bf16.msra.mxu0 %v579
    %1114 = vmatprep.subr.bf16.mxu0 %v576
    %1115 = vmatpush2.bf16.msra.mxu0 %v575
    %1116 = vmatprep.subr.bf16.mxu0 %v572
    %1117 = vmatpush2.bf16.msra.mxu0 %v571
    %1118 = vmatprep.subr.bf16.mxu0 %v568
    %1119 = vmatpush2.bf16.msra.mxu0 %v567
    %1120 = vmatprep.subr.bf16.mxu0 %v564
    %1121 = vmatpush2.bf16.msra.mxu0 %v563
    %1122 = vmatprep.subr.bf16.mxu0 %v560
    %1123 = vmatpush2.bf16.msra.mxu0 %v559
    %1124 = vmatprep.subr.bf16.mxu0 %v556
    %1125 = vmatpush2.bf16.msra.mxu0 %v555
    %1126 = vmatprep.mubr.bf16.mxu0 %v1022
    %1127 = vmatmul.mubr.bf16.gmra.mxu0 %v1021
    %v1128 = vpop.f32.mrf.mxu0
    %v1129 = vadd.f32 %v1086, %v1128
    %v1130 = vpop.f32.mrf.mxu0
    %v1131 = vadd.f32 %v1088, %v1130
    %v1132 = vpop.f32.mrf.mxu0
    %v1133 = vadd.f32 %v1090, %v1132
    %v1134 = vpop.f32.mrf.mxu0
    %v1135 = vadd.f32 %v1092, %v1134
    %1136 = vdwg.mxu0
    %1137 = vmatprep.subr.bf16.mxu0 %v616
    %1138 = vmatpush1.bf16.msra.mxu0 %v615
    %1139 = vmatprep.subr.bf16.mxu0 %v612
    %1140 = vmatpush1.bf16.msra.mxu0 %v611
    %1141 = vmatprep.subr.bf16.mxu0 %v608
    %1142 = vmatpush1.bf16.msra.mxu0 %v607
    %1143 = vmatprep.subr.bf16.mxu0 %v604
    %1144 = vmatpush1.bf16.msra.mxu0 %v603
    %1145 = vmatprep.subr.bf16.mxu0 %v600
    %1146 = vmatpush1.bf16.msra.mxu0 %v599
    %1147 = vmatprep.subr.bf16.mxu0 %v596
    %1148 = vmatpush1.bf16.msra.mxu0 %v595
    %1149 = vmatprep.subr.bf16.mxu0 %v592
    %1150 = vmatpush1.bf16.msra.mxu0 %v591
    %1151 = vmatprep.subr.bf16.mxu0 %v588
    %1152 = vmatpush1.bf16.msra.mxu0 %v587
    %1153 = vmatprep.subr.bf16.mxu0 %v648
    %1154 = vmatpush2.bf16.msra.mxu0 %v647
    %1155 = vmatprep.subr.bf16.mxu0 %v644
    %1156 = vmatpush2.bf16.msra.mxu0 %v643
    %1157 = vmatprep.subr.bf16.mxu0 %v640
    %1158 = vmatpush2.bf16.msra.mxu0 %v639
    %1159 = vmatprep.subr.bf16.mxu0 %v636
    %1160 = vmatpush2.bf16.msra.mxu0 %v635
    %1161 = vmatprep.subr.bf16.mxu0 %v632
    %1162 = vmatpush2.bf16.msra.mxu0 %v631
    %1163 = vmatprep.subr.bf16.mxu0 %v628
    %1164 = vmatpush2.bf16.msra.mxu0 %v627
    %1165 = vmatprep.subr.bf16.mxu0 %v624
    %1166 = vmatpush2.bf16.msra.mxu0 %v623
    %1167 = vmatprep.subr.bf16.mxu0 %v620
    %1168 = vmatpush2.bf16.msra.mxu0 %v619
    %1169 = vmatprep.mubr.bf16.mxu0 %v1024
    %1170 = vmatmul.mubr.bf16.gmra.mxu0 %v1023
    %v1171 = vpop.f32.mrf.mxu0
    %v1172 = vadd.f32 %v1129, %v1171
    %v1173 = vpop.f32.mrf.mxu0
    %v1174 = vadd.f32 %v1131, %v1173
    %v1175 = vpop.f32.mrf.mxu0
    %v1176 = vadd.f32 %v1133, %v1175
    %v1177 = vpop.f32.mrf.mxu0
    %v1178 = vadd.f32 %v1135, %v1177
    %1179 = vdwg.mxu0
    %1180 = vmatprep.subr.bf16.mxu0 %v680
    %1181 = vmatpush1.bf16.msra.mxu0 %v679
    %1182 = vmatprep.subr.bf16.mxu0 %v676
    %1183 = vmatpush1.bf16.msra.mxu0 %v675
    %1184 = vmatprep.subr.bf16.mxu0 %v672
    %1185 = vmatpush1.bf16.msra.mxu0 %v671
    %1186 = vmatprep.subr.bf16.mxu0 %v668
    %1187 = vmatpush1.bf16.msra.mxu0 %v667
    %1188 = vmatprep.subr.bf16.mxu0 %v664
    %1189 = vmatpush1.bf16.msra.mxu0 %v663
    %1190 = vmatprep.subr.bf16.mxu0 %v660
    %1191 = vmatpush1.bf16.msra.mxu0 %v659
    %1192 = vmatprep.subr.bf16.mxu0 %v656
    %1193 = vmatpush1.bf16.msra.mxu0 %v655
    %1194 = vmatprep.subr.bf16.mxu0 %v652
    %1195 = vmatpush1.bf16.msra.mxu0 %v651
    %1196 = vmatprep.subr.bf16.mxu0 %v712
    %1197 = vmatpush2.bf16.msra.mxu0 %v711
    %1198 = vmatprep.subr.bf16.mxu0 %v708
    %1199 = vmatpush2.bf16.msra.mxu0 %v707
    %1200 = vmatprep.subr.bf16.mxu0 %v704
    %1201 = vmatpush2.bf16.msra.mxu0 %v703
    %1202 = vmatprep.subr.bf16.mxu0 %v700
    %1203 = vmatpush2.bf16.msra.mxu0 %v699
    %1204 = vmatprep.subr.bf16.mxu0 %v696
    %1205 = vmatpush2.bf16.msra.mxu0 %v695
    %1206 = vmatprep.subr.bf16.mxu0 %v692
    %1207 = vmatpush2.bf16.msra.mxu0 %v691
    %1208 = vmatprep.subr.bf16.mxu0 %v688
    %1209 = vmatpush2.bf16.msra.mxu0 %v687
    %1210 = vmatprep.subr.bf16.mxu0 %v684
    %1211 = vmatpush2.bf16.msra.mxu0 %v683
    %1212 = vmatprep.mubr.bf16.mxu0 %v1026
    %1213 = vmatmul.mubr.bf16.gmra.mxu0 %v1025
    %v1214 = vpop.f32.mrf.mxu0
    %v1215 = vadd.f32 %v1172, %v1214
    %v1216 = vpop.f32.mrf.mxu0
    %v1217 = vadd.f32 %v1174, %v1216
    %v1218 = vpop.f32.mrf.mxu0
    %v1219 = vadd.f32 %v1176, %v1218
    %v1220 = vpop.f32.mrf.mxu0
    %v1221 = vadd.f32 %v1178, %v1220
    %1222 = vdwg.mxu0
    %1223 = vmatprep.subr.bf16.mxu0 %v744
    %1224 = vmatpush1.bf16.msra.mxu0 %v743
    %1225 = vmatprep.subr.bf16.mxu0 %v740
    %1226 = vmatpush1.bf16.msra.mxu0 %v739
    %1227 = vmatprep.subr.bf16.mxu0 %v736
    %1228 = vmatpush1.bf16.msra.mxu0 %v735
    %1229 = vmatprep.subr.bf16.mxu0 %v732
    %1230 = vmatpush1.bf16.msra.mxu0 %v731
    %1231 = vmatprep.subr.bf16.mxu0 %v728
    %1232 = vmatpush1.bf16.msra.mxu0 %v727
    %1233 = vmatprep.subr.bf16.mxu0 %v724
    %1234 = vmatpush1.bf16.msra.mxu0 %v723
    %1235 = vmatprep.subr.bf16.mxu0 %v720
    %1236 = vmatpush1.bf16.msra.mxu0 %v719
    %1237 = vmatprep.subr.bf16.mxu0 %v716
    %1238 = vmatpush1.bf16.msra.mxu0 %v715
    %1239 = vmatprep.subr.bf16.mxu0 %v776
    %1240 = vmatpush2.bf16.msra.mxu0 %v775
    %1241 = vmatprep.subr.bf16.mxu0 %v772
    %1242 = vmatpush2.bf16.msra.mxu0 %v771
    %1243 = vmatprep.subr.bf16.mxu0 %v768
    %1244 = vmatpush2.bf16.msra.mxu0 %v767
    %1245 = vmatprep.subr.bf16.mxu0 %v764
    %1246 = vmatpush2.bf16.msra.mxu0 %v763
    %1247 = vmatprep.subr.bf16.mxu0 %v760
    %1248 = vmatpush2.bf16.msra.mxu0 %v759
    %1249 = vmatprep.subr.bf16.mxu0 %v756
    %1250 = vmatpush2.bf16.msra.mxu0 %v755
    %1251 = vmatprep.subr.bf16.mxu0 %v752
    %1252 = vmatpush2.bf16.msra.mxu0 %v751
    %1253 = vmatprep.subr.bf16.mxu0 %v748
    %1254 = vmatpush2.bf16.msra.mxu0 %v747
    %1255 = vmatprep.mubr.bf16.mxu0 %v1028
    %1256 = vmatmul.mubr.bf16.gmra.mxu0 %v1027
    %v1257 = vpop.f32.mrf.mxu0
    %v1258 = vadd.f32 %v1215, %v1257
    %v1259 = vpop.f32.mrf.mxu0
    %v1260 = vadd.f32 %v1217, %v1259
    %v1261 = vpop.f32.mrf.mxu0
    %v1262 = vadd.f32 %v1219, %v1261
    %v1263 = vpop.f32.mrf.mxu0
    %v1264 = vadd.f32 %v1221, %v1263
    %1265 = vdwg.mxu0
    %1266 = vmatprep.subr.bf16.mxu0 %v808
    %1267 = vmatpush1.bf16.msra.mxu0 %v807
    %1268 = vmatprep.subr.bf16.mxu0 %v804
    %1269 = vmatpush1.bf16.msra.mxu0 %v803
    %1270 = vmatprep.subr.bf16.mxu0 %v800
    %1271 = vmatpush1.bf16.msra.mxu0 %v799
    %1272 = vmatprep.subr.bf16.mxu0 %v796
    %1273 = vmatpush1.bf16.msra.mxu0 %v795
    %1274 = vmatprep.subr.bf16.mxu0 %v792
    %1275 = vmatpush1.bf16.msra.mxu0 %v791
    %1276 = vmatprep.subr.bf16.mxu0 %v788
    %1277 = vmatpush1.bf16.msra.mxu0 %v787
    %1278 = vmatprep.subr.bf16.mxu0 %v784
    %1279 = vmatpush1.bf16.msra.mxu0 %v783
    %1280 = vmatprep.subr.bf16.mxu0 %v780
    %1281 = vmatpush1.bf16.msra.mxu0 %v779
    %1282 = vmatprep.subr.bf16.mxu0 %v840
    %1283 = vmatpush2.bf16.msra.mxu0 %v839
    %1284 = vmatprep.subr.bf16.mxu0 %v836
    %1285 = vmatpush2.bf16.msra.mxu0 %v835
    %1286 = vmatprep.subr.bf16.mxu0 %v832
    %1287 = vmatpush2.bf16.msra.mxu0 %v831
    %1288 = vmatprep.subr.bf16.mxu0 %v828
    %1289 = vmatpush2.bf16.msra.mxu0 %v827
    %1290 = vmatprep.subr.bf16.mxu0 %v824
    %1291 = vmatpush2.bf16.msra.mxu0 %v823
    %1292 = vmatprep.subr.bf16.mxu0 %v820
    %1293 = vmatpush2.bf16.msra.mxu0 %v819
    %1294 = vmatprep.subr.bf16.mxu0 %v816
    %1295 = vmatpush2.bf16.msra.mxu0 %v815
    %1296 = vmatprep.subr.bf16.mxu0 %v812
    %1297 = vmatpush2.bf16.msra.mxu0 %v811
    %1298 = vmatprep.mubr.bf16.mxu0 %v1030
    %1299 = vmatmul.mubr.bf16.gmra.mxu0 %v1029
    %v1300 = vpop.f32.mrf.mxu0
    %v1301 = vadd.f32 %v1258, %v1300
    %v1302 = vpop.f32.mrf.mxu0
    %v1303 = vadd.f32 %v1260, %v1302
    %v1304 = vpop.f32.mrf.mxu0
    %v1305 = vadd.f32 %v1262, %v1304
    %v1306 = vpop.f32.mrf.mxu0
    %v1307 = vadd.f32 %v1264, %v1306
    %1308 = vdwg.mxu0
    %1309 = vmatprep.subr.bf16.mxu0 %v872
    %1310 = vmatpush1.bf16.msra.mxu0 %v871
    %1311 = vmatprep.subr.bf16.mxu0 %v868
    %1312 = vmatpush1.bf16.msra.mxu0 %v867
    %1313 = vmatprep.subr.bf16.mxu0 %v864
    %1314 = vmatpush1.bf16.msra.mxu0 %v863
    %1315 = vmatprep.subr.bf16.mxu0 %v860
    %1316 = vmatpush1.bf16.msra.mxu0 %v859
    %1317 = vmatprep.subr.bf16.mxu0 %v856
    %1318 = vmatpush1.bf16.msra.mxu0 %v855
    %1319 = vmatprep.subr.bf16.mxu0 %v852
    %1320 = vmatpush1.bf16.msra.mxu0 %v851
    %1321 = vmatprep.subr.bf16.mxu0 %v848
    %1322 = vmatpush1.bf16.msra.mxu0 %v847
    %1323 = vmatprep.subr.bf16.mxu0 %v844
    %1324 = vmatpush1.bf16.msra.mxu0 %v843
    %1325 = vmatprep.subr.bf16.mxu0 %v904
    %1326 = vmatpush2.bf16.msra.mxu0 %v903
    %1327 = vmatprep.subr.bf16.mxu0 %v900
    %1328 = vmatpush2.bf16.msra.mxu0 %v899
    %1329 = vmatprep.subr.bf16.mxu0 %v896
    %1330 = vmatpush2.bf16.msra.mxu0 %v895
    %1331 = vmatprep.subr.bf16.mxu0 %v892
    %1332 = vmatpush2.bf16.msra.mxu0 %v891
    %1333 = vmatprep.subr.bf16.mxu0 %v888
    %1334 = vmatpush2.bf16.msra.mxu0 %v887
    %1335 = vmatprep.subr.bf16.mxu0 %v884
    %1336 = vmatpush2.bf16.msra.mxu0 %v883
    %1337 = vmatprep.subr.bf16.mxu0 %v880
    %1338 = vmatpush2.bf16.msra.mxu0 %v879
    %1339 = vmatprep.subr.bf16.mxu0 %v876
    %1340 = vmatpush2.bf16.msra.mxu0 %v875
    %1341 = vmatprep.mubr.bf16.mxu0 %v1032
    %1342 = vmatmul.mubr.bf16.gmra.mxu0 %v1031
    %v1343 = vpop.f32.mrf.mxu0
    %v1344 = vadd.f32 %v1301, %v1343
    %v1345 = vpop.f32.mrf.mxu0
    %v1346 = vadd.f32 %v1303, %v1345
    %v1347 = vpop.f32.mrf.mxu0
    %v1348 = vadd.f32 %v1305, %v1347
    %v1349 = vpop.f32.mrf.mxu0
    %v1350 = vadd.f32 %v1307, %v1349
    %1351 = vdwg.mxu0
    %1352 = vmatprep.subr.bf16.mxu0 %v936
    %1353 = vmatpush1.bf16.msra.mxu0 %v935
    %1354 = vmatprep.subr.bf16.mxu0 %v932
    %1355 = vmatpush1.bf16.msra.mxu0 %v931
    %1356 = vmatprep.subr.bf16.mxu0 %v928
    %1357 = vmatpush1.bf16.msra.mxu0 %v927
    %1358 = vmatprep.subr.bf16.mxu0 %v924
    %1359 = vmatpush1.bf16.msra.mxu0 %v923
    %1360 = vmatprep.subr.bf16.mxu0 %v920
    %1361 = vmatpush1.bf16.msra.mxu0 %v919
    %1362 = vmatprep.subr.bf16.mxu0 %v916
    %1363 = vmatpush1.bf16.msra.mxu0 %v915
    %1364 = vmatprep.subr.bf16.mxu0 %v912
    %1365 = vmatpush1.bf16.msra.mxu0 %v911
    %1366 = vmatprep.subr.bf16.mxu0 %v908
    %1367 = vmatpush1.bf16.msra.mxu0 %v907
    %1368 = vmatprep.subr.bf16.mxu0 %v968
    %1369 = vmatpush2.bf16.msra.mxu0 %v967
    %1370 = vmatprep.subr.bf16.mxu0 %v964
    %1371 = vmatpush2.bf16.msra.mxu0 %v963
    %1372 = vmatprep.subr.bf16.mxu0 %v960
    %1373 = vmatpush2.bf16.msra.mxu0 %v959
    %1374 = vmatprep.subr.bf16.mxu0 %v956
    %1375 = vmatpush2.bf16.msra.mxu0 %v955
    %1376 = vmatprep.subr.bf16.mxu0 %v952
    %1377 = vmatpush2.bf16.msra.mxu0 %v951
    %1378 = vmatprep.subr.bf16.mxu0 %v948
    %1379 = vmatpush2.bf16.msra.mxu0 %v947
    %1380 = vmatprep.subr.bf16.mxu0 %v944
    %1381 = vmatpush2.bf16.msra.mxu0 %v943
    %1382 = vmatprep.subr.bf16.mxu0 %v940
    %1383 = vmatpush2.bf16.msra.mxu0 %v939
    %1384 = vmatprep.mubr.bf16.mxu0 %v1034
    %1385 = vmatmul.mubr.bf16.gmra.mxu0 %v1033
    %v1386 = vpop.f32.mrf.mxu0
    %v1387 = vadd.f32 %v1344, %v1386
    %v1388 = vpop.f32.mrf.mxu0
    %v1389 = vadd.f32 %v1346, %v1388
    %v1390 = vpop.f32.mrf.mxu0
    %v1391 = vadd.f32 %v1348, %v1390
    %v1392 = vpop.f32.mrf.mxu0
    %v1393 = vadd.f32 %v1350, %v1392
    %1394 = vdwg.mxu0
    %1395 = vmatprep.subr.bf16.mxu0 %v490
    %1396 = vmatpush1.bf16.msra.mxu0 %v489
    %1397 = vmatprep.subr.bf16.mxu0 %v486
    %1398 = vmatpush1.bf16.msra.mxu0 %v485
    %1399 = vmatprep.subr.bf16.mxu0 %v482
    %1400 = vmatpush1.bf16.msra.mxu0 %v481
    %1401 = vmatprep.subr.bf16.mxu0 %v478
    %1402 = vmatpush1.bf16.msra.mxu0 %v477
    %1403 = vmatprep.subr.bf16.mxu0 %v474
    %1404 = vmatpush1.bf16.msra.mxu0 %v473
    %1405 = vmatprep.subr.bf16.mxu0 %v470
    %1406 = vmatpush1.bf16.msra.mxu0 %v469
    %1407 = vmatprep.subr.bf16.mxu0 %v466
    %1408 = vmatpush1.bf16.msra.mxu0 %v465
    %1409 = vmatprep.subr.bf16.mxu0 %v462
    %1410 = vmatpush1.bf16.msra.mxu0 %v461
    %1411 = vmatprep.subr.bf16.mxu0 %v522
    %1412 = vmatpush2.bf16.msra.mxu0 %v521
    %1413 = vmatprep.subr.bf16.mxu0 %v518
    %1414 = vmatpush2.bf16.msra.mxu0 %v517
    %1415 = vmatprep.subr.bf16.mxu0 %v514
    %1416 = vmatpush2.bf16.msra.mxu0 %v513
    %1417 = vmatprep.subr.bf16.mxu0 %v510
    %1418 = vmatpush2.bf16.msra.mxu0 %v509
    %1419 = vmatprep.subr.bf16.mxu0 %v506
    %1420 = vmatpush2.bf16.msra.mxu0 %v505
    %1421 = vmatprep.subr.bf16.mxu0 %v502
    %1422 = vmatpush2.bf16.msra.mxu0 %v501
    %1423 = vmatprep.subr.bf16.mxu0 %v498
    %1424 = vmatpush2.bf16.msra.mxu0 %v497
    %1425 = vmatprep.subr.bf16.mxu0 %v494
    %1426 = vmatpush2.bf16.msra.mxu0 %v493
    %1427 = vmatprep.mubr.bf16.mxu0 %v1020
    %1428 = vmatmul.mubr.bf16.gmra.mxu0 %v1019
    %v1429 = vpop.f32.mrf.mxu0
    %v1430 = vadd.f32 0.0, %v1429
    %v1431 = vpop.f32.mrf.mxu0
    %v1432 = vadd.f32 0.0, %v1431
    %v1433 = vpop.f32.mrf.mxu0
    %v1434 = vadd.f32 0.0, %v1433
    %v1435 = vpop.f32.mrf.mxu0
    %v1436 = vadd.f32 0.0, %v1435
    %1437 = vdwg.mxu0
    %1438 = vmatprep.subr.bf16.mxu0 %v554
    %1439 = vmatpush1.bf16.msra.mxu0 %v553
    %1440 = vmatprep.subr.bf16.mxu0 %v550
    %1441 = vmatpush1.bf16.msra.mxu0 %v549
    %1442 = vmatprep.subr.bf16.mxu0 %v546
    %1443 = vmatpush1.bf16.msra.mxu0 %v545
    %1444 = vmatprep.subr.bf16.mxu0 %v542
    %1445 = vmatpush1.bf16.msra.mxu0 %v541
    %1446 = vmatprep.subr.bf16.mxu0 %v538
    %1447 = vmatpush1.bf16.msra.mxu0 %v537
    %1448 = vmatprep.subr.bf16.mxu0 %v534
    %1449 = vmatpush1.bf16.msra.mxu0 %v533
    %1450 = vmatprep.subr.bf16.mxu0 %v530
    %1451 = vmatpush1.bf16.msra.mxu0 %v529
    %1452 = vmatprep.subr.bf16.mxu0 %v526
    %1453 = vmatpush1.bf16.msra.mxu0 %v525
    %1454 = vmatprep.subr.bf16.mxu0 %v586
    %1455 = vmatpush2.bf16.msra.mxu0 %v585
    %1456 = vmatprep.subr.bf16.mxu0 %v582
    %1457 = vmatpush2.bf16.msra.mxu0 %v581
    %1458 = vmatprep.subr.bf16.mxu0 %v578
    %1459 = vmatpush2.bf16.msra.mxu0 %v577
    %1460 = vmatprep.subr.bf16.mxu0 %v574
    %1461 = vmatpush2.bf16.msra.mxu0 %v573
    %1462 = vmatprep.subr.bf16.mxu0 %v570
    %1463 = vmatpush2.bf16.msra.mxu0 %v569
    %1464 = vmatprep.subr.bf16.mxu0 %v566
    %1465 = vmatpush2.bf16.msra.mxu0 %v565
    %1466 = vmatprep.subr.bf16.mxu0 %v562
    %1467 = vmatpush2.bf16.msra.mxu0 %v561
    %1468 = vmatprep.subr.bf16.mxu0 %v558
    %1469 = vmatpush2.bf16.msra.mxu0 %v557
    %1470 = vmatprep.mubr.bf16.mxu0 %v1022
    %1471 = vmatmul.mubr.bf16.gmra.mxu0 %v1021
    %v1472 = vpop.f32.mrf.mxu0
    %v1473 = vadd.f32 %v1430, %v1472
    %v1474 = vpop.f32.mrf.mxu0
    %v1475 = vadd.f32 %v1432, %v1474
    %v1476 = vpop.f32.mrf.mxu0
    %v1477 = vadd.f32 %v1434, %v1476
    %v1478 = vpop.f32.mrf.mxu0
    %v1479 = vadd.f32 %v1436, %v1478
    %1480 = vdwg.mxu0
    %1481 = vmatprep.subr.bf16.mxu0 %v618
    %1482 = vmatpush1.bf16.msra.mxu0 %v617
    %1483 = vmatprep.subr.bf16.mxu0 %v614
    %1484 = vmatpush1.bf16.msra.mxu0 %v613
    %1485 = vmatprep.subr.bf16.mxu0 %v610
    %1486 = vmatpush1.bf16.msra.mxu0 %v609
    %1487 = vmatprep.subr.bf16.mxu0 %v606
    %1488 = vmatpush1.bf16.msra.mxu0 %v605
    %1489 = vmatprep.subr.bf16.mxu0 %v602
    %1490 = vmatpush1.bf16.msra.mxu0 %v601
    %1491 = vmatprep.subr.bf16.mxu0 %v598
    %1492 = vmatpush1.bf16.msra.mxu0 %v597
    %1493 = vmatprep.subr.bf16.mxu0 %v594
    %1494 = vmatpush1.bf16.msra.mxu0 %v593
    %1495 = vmatprep.subr.bf16.mxu0 %v590
    %1496 = vmatpush1.bf16.msra.mxu0 %v589
    %1497 = vmatprep.subr.bf16.mxu0 %v650
    %1498 = vmatpush2.bf16.msra.mxu0 %v649
    %1499 = vmatprep.subr.bf16.mxu0 %v646
    %1500 = vmatpush2.bf16.msra.mxu0 %v645
    %1501 = vmatprep.subr.bf16.mxu0 %v642
    %1502 = vmatpush2.bf16.msra.mxu0 %v641
    %1503 = vmatprep.subr.bf16.mxu0 %v638
    %1504 = vmatpush2.bf16.msra.mxu0 %v637
    %1505 = vmatprep.subr.bf16.mxu0 %v634
    %1506 = vmatpush2.bf16.msra.mxu0 %v633
    %1507 = vmatprep.subr.bf16.mxu0 %v630
    %1508 = vmatpush2.bf16.msra.mxu0 %v629
    %1509 = vmatprep.subr.bf16.mxu0 %v626
    %1510 = vmatpush2.bf16.msra.mxu0 %v625
    %1511 = vmatprep.subr.bf16.mxu0 %v622
    %1512 = vmatpush2.bf16.msra.mxu0 %v621
    %1513 = vmatprep.mubr.bf16.mxu0 %v1024
    %1514 = vmatmul.mubr.bf16.gmra.mxu0 %v1023
    %v1515 = vpop.f32.mrf.mxu0
    %v1516 = vadd.f32 %v1473, %v1515
    %v1517 = vpop.f32.mrf.mxu0
    %v1518 = vadd.f32 %v1475, %v1517
    %v1519 = vpop.f32.mrf.mxu0
    %v1520 = vadd.f32 %v1477, %v1519
    %v1521 = vpop.f32.mrf.mxu0
    %v1522 = vadd.f32 %v1479, %v1521
    %1523 = vdwg.mxu0
    %1524 = vmatprep.subr.bf16.mxu0 %v682
    %1525 = vmatpush1.bf16.msra.mxu0 %v681
    %1526 = vmatprep.subr.bf16.mxu0 %v678
    %1527 = vmatpush1.bf16.msra.mxu0 %v677
    %1528 = vmatprep.subr.bf16.mxu0 %v674
    %1529 = vmatpush1.bf16.msra.mxu0 %v673
    %1530 = vmatprep.subr.bf16.mxu0 %v670
    %1531 = vmatpush1.bf16.msra.mxu0 %v669
    %1532 = vmatprep.subr.bf16.mxu0 %v666
    %1533 = vmatpush1.bf16.msra.mxu0 %v665
    %1534 = vmatprep.subr.bf16.mxu0 %v662
    %1535 = vmatpush1.bf16.msra.mxu0 %v661
    %1536 = vmatprep.subr.bf16.mxu0 %v658
    %1537 = vmatpush1.bf16.msra.mxu0 %v657
    %1538 = vmatprep.subr.bf16.mxu0 %v654
    %1539 = vmatpush1.bf16.msra.mxu0 %v653
    %1540 = vmatprep.subr.bf16.mxu0 %v714
    %1541 = vmatpush2.bf16.msra.mxu0 %v713
    %1542 = vmatprep.subr.bf16.mxu0 %v710
    %1543 = vmatpush2.bf16.msra.mxu0 %v709
    %1544 = vmatprep.subr.bf16.mxu0 %v706
    %1545 = vmatpush2.bf16.msra.mxu0 %v705
    %1546 = vmatprep.subr.bf16.mxu0 %v702
    %1547 = vmatpush2.bf16.msra.mxu0 %v701
    %1548 = vmatprep.subr.bf16.mxu0 %v698
    %1549 = vmatpush2.bf16.msra.mxu0 %v697
    %1550 = vmatprep.subr.bf16.mxu0 %v694
    %1551 = vmatpush2.bf16.msra.mxu0 %v693
    %1552 = vmatprep.subr.bf16.mxu0 %v690
    %1553 = vmatpush2.bf16.msra.mxu0 %v689
    %1554 = vmatprep.subr.bf16.mxu0 %v686
    %1555 = vmatpush2.bf16.msra.mxu0 %v685
    %1556 = vmatprep.mubr.bf16.mxu0 %v1026
    %1557 = vmatmul.mubr.bf16.gmra.mxu0 %v1025
    %v1558 = vpop.f32.mrf.mxu0
    %v1559 = vadd.f32 %v1516, %v1558
    %v1560 = vpop.f32.mrf.mxu0
    %v1561 = vadd.f32 %v1518, %v1560
    %v1562 = vpop.f32.mrf.mxu0
    %v1563 = vadd.f32 %v1520, %v1562
    %v1564 = vpop.f32.mrf.mxu0
    %v1565 = vadd.f32 %v1522, %v1564
    %1566 = vdwg.mxu0
    %1567 = vmatprep.subr.bf16.mxu0 %v746
    %1568 = vmatpush1.bf16.msra.mxu0 %v745
    %1569 = vmatprep.subr.bf16.mxu0 %v742
    %1570 = vmatpush1.bf16.msra.mxu0 %v741
    %1571 = vmatprep.subr.bf16.mxu0 %v738
    %1572 = vmatpush1.bf16.msra.mxu0 %v737
    %1573 = vmatprep.subr.bf16.mxu0 %v734
    %1574 = vmatpush1.bf16.msra.mxu0 %v733
    %1575 = vmatprep.subr.bf16.mxu0 %v730
    %1576 = vmatpush1.bf16.msra.mxu0 %v729
    %1577 = vmatprep.subr.bf16.mxu0 %v726
    %1578 = vmatpush1.bf16.msra.mxu0 %v725
    %1579 = vmatprep.subr.bf16.mxu0 %v722
    %1580 = vmatpush1.bf16.msra.mxu0 %v721
    %1581 = vmatprep.subr.bf16.mxu0 %v718
    %1582 = vmatpush1.bf16.msra.mxu0 %v717
    %1583 = vmatprep.subr.bf16.mxu0 %v778
    %1584 = vmatpush2.bf16.msra.mxu0 %v777
    %1585 = vmatprep.subr.bf16.mxu0 %v774
    %1586 = vmatpush2.bf16.msra.mxu0 %v773
    %1587 = vmatprep.subr.bf16.mxu0 %v770
    %1588 = vmatpush2.bf16.msra.mxu0 %v769
    %1589 = vmatprep.subr.bf16.mxu0 %v766
    %1590 = vmatpush2.bf16.msra.mxu0 %v765
    %1591 = vmatprep.subr.bf16.mxu0 %v762
    %1592 = vmatpush2.bf16.msra.mxu0 %v761
    %1593 = vmatprep.subr.bf16.mxu0 %v758
    %1594 = vmatpush2.bf16.msra.mxu0 %v757
    %1595 = vmatprep.subr.bf16.mxu0 %v754
    %1596 = vmatpush2.bf16.msra.mxu0 %v753
    %1597 = vmatprep.subr.bf16.mxu0 %v750
    %1598 = vmatpush2.bf16.msra.mxu0 %v749
    %1599 = vmatprep.mubr.bf16.mxu0 %v1028
    %1600 = vmatmul.mubr.bf16.gmra.mxu0 %v1027
    %v1601 = vpop.f32.mrf.mxu0
    %v1602 = vadd.f32 %v1559, %v1601
    %v1603 = vpop.f32.mrf.mxu0
    %v1604 = vadd.f32 %v1561, %v1603
    %v1605 = vpop.f32.mrf.mxu0
    %v1606 = vadd.f32 %v1563, %v1605
    %v1607 = vpop.f32.mrf.mxu0
    %v1608 = vadd.f32 %v1565, %v1607
    %1609 = vdwg.mxu0
    %1610 = vmatprep.subr.bf16.mxu0 %v810
    %1611 = vmatpush1.bf16.msra.mxu0 %v809
    %1612 = vmatprep.subr.bf16.mxu0 %v806
    %1613 = vmatpush1.bf16.msra.mxu0 %v805
    %1614 = vmatprep.subr.bf16.mxu0 %v802
    %1615 = vmatpush1.bf16.msra.mxu0 %v801
    %1616 = vmatprep.subr.bf16.mxu0 %v798
    %1617 = vmatpush1.bf16.msra.mxu0 %v797
    %1618 = vmatprep.subr.bf16.mxu0 %v794
    %1619 = vmatpush1.bf16.msra.mxu0 %v793
    %1620 = vmatprep.subr.bf16.mxu0 %v790
    %1621 = vmatpush1.bf16.msra.mxu0 %v789
    %1622 = vmatprep.subr.bf16.mxu0 %v786
    %1623 = vmatpush1.bf16.msra.mxu0 %v785
    %1624 = vmatprep.subr.bf16.mxu0 %v782
    %1625 = vmatpush1.bf16.msra.mxu0 %v781
    %1626 = vmatprep.subr.bf16.mxu0 %v842
    %1627 = vmatpush2.bf16.msra.mxu0 %v841
    %1628 = vmatprep.subr.bf16.mxu0 %v838
    %1629 = vmatpush2.bf16.msra.mxu0 %v837
    %1630 = vmatprep.subr.bf16.mxu0 %v834
    %1631 = vmatpush2.bf16.msra.mxu0 %v833
    %1632 = vmatprep.subr.bf16.mxu0 %v830
    %1633 = vmatpush2.bf16.msra.mxu0 %v829
    %1634 = vmatprep.subr.bf16.mxu0 %v826
    %1635 = vmatpush2.bf16.msra.mxu0 %v825
    %1636 = vmatprep.subr.bf16.mxu0 %v822
    %1637 = vmatpush2.bf16.msra.mxu0 %v821
    %1638 = vmatprep.subr.bf16.mxu0 %v818
    %1639 = vmatpush2.bf16.msra.mxu0 %v817
    %1640 = vmatprep.subr.bf16.mxu0 %v814
    %1641 = vmatpush2.bf16.msra.mxu0 %v813
    %1642 = vmatprep.mubr.bf16.mxu0 %v1030
    %1643 = vmatmul.mubr.bf16.gmra.mxu0 %v1029
    %v1644 = vpop.f32.mrf.mxu0
    %v1645 = vadd.f32 %v1602, %v1644
    %v1646 = vpop.f32.mrf.mxu0
    %v1647 = vadd.f32 %v1604, %v1646
    %v1648 = vpop.f32.mrf.mxu0
    %v1649 = vadd.f32 %v1606, %v1648
    %v1650 = vpop.f32.mrf.mxu0
    %v1651 = vadd.f32 %v1608, %v1650
    %1652 = vdwg.mxu0
    %1653 = vmatprep.subr.bf16.mxu0 %v874
    %1654 = vmatpush1.bf16.msra.mxu0 %v873
    %1655 = vmatprep.subr.bf16.mxu0 %v870
    %1656 = vmatpush1.bf16.msra.mxu0 %v869
    %1657 = vmatprep.subr.bf16.mxu0 %v866
    %1658 = vmatpush1.bf16.msra.mxu0 %v865
    %1659 = vmatprep.subr.bf16.mxu0 %v862
    %1660 = vmatpush1.bf16.msra.mxu0 %v861
    %1661 = vmatprep.subr.bf16.mxu0 %v858
    %1662 = vmatpush1.bf16.msra.mxu0 %v857
    %1663 = vmatprep.subr.bf16.mxu0 %v854
    %1664 = vmatpush1.bf16.msra.mxu0 %v853
    %1665 = vmatprep.subr.bf16.mxu0 %v850
    %1666 = vmatpush1.bf16.msra.mxu0 %v849
    %1667 = vmatprep.subr.bf16.mxu0 %v846
    %1668 = vmatpush1.bf16.msra.mxu0 %v845
    %1669 = vmatprep.subr.bf16.mxu0 %v906
    %1670 = vmatpush2.bf16.msra.mxu0 %v905
    %1671 = vmatprep.subr.bf16.mxu0 %v902
    %1672 = vmatpush2.bf16.msra.mxu0 %v901
    %1673 = vmatprep.subr.bf16.mxu0 %v898
    %1674 = vmatpush2.bf16.msra.mxu0 %v897
    %1675 = vmatprep.subr.bf16.mxu0 %v894
    %1676 = vmatpush2.bf16.msra.mxu0 %v893
    %1677 = vmatprep.subr.bf16.mxu0 %v890
    %1678 = vmatpush2.bf16.msra.mxu0 %v889
    %1679 = vmatprep.subr.bf16.mxu0 %v886
    %1680 = vmatpush2.bf16.msra.mxu0 %v885
    %1681 = vmatprep.subr.bf16.mxu0 %v882
    %1682 = vmatpush2.bf16.msra.mxu0 %v881
    %1683 = vmatprep.subr.bf16.mxu0 %v878
    %1684 = vmatpush2.bf16.msra.mxu0 %v877
    %1685 = vmatprep.mubr.bf16.mxu0 %v1032
    %1686 = vmatmul.mubr.bf16.gmra.mxu0 %v1031
    %v1687 = vpop.f32.mrf.mxu0
    %v1688 = vadd.f32 %v1645, %v1687
    %v1689 = vpop.f32.mrf.mxu0
    %v1690 = vadd.f32 %v1647, %v1689
    %v1691 = vpop.f32.mrf.mxu0
    %v1692 = vadd.f32 %v1649, %v1691
    %v1693 = vpop.f32.mrf.mxu0
    %v1694 = vadd.f32 %v1651, %v1693
    %1695 = vdwg.mxu0
    %1696 = vmatprep.subr.bf16.mxu0 %v938
    %1697 = vmatpush1.bf16.msra.mxu0 %v937
    %1698 = vmatprep.subr.bf16.mxu0 %v934
    %1699 = vmatpush1.bf16.msra.mxu0 %v933
    %1700 = vmatprep.subr.bf16.mxu0 %v930
    %1701 = vmatpush1.bf16.msra.mxu0 %v929
    %1702 = vmatprep.subr.bf16.mxu0 %v926
    %1703 = vmatpush1.bf16.msra.mxu0 %v925
    %1704 = vmatprep.subr.bf16.mxu0 %v922
    %1705 = vmatpush1.bf16.msra.mxu0 %v921
    %1706 = vmatprep.subr.bf16.mxu0 %v918
    %1707 = vmatpush1.bf16.msra.mxu0 %v917
    %1708 = vmatprep.subr.bf16.mxu0 %v914
    %1709 = vmatpush1.bf16.msra.mxu0 %v913
    %1710 = vmatprep.subr.bf16.mxu0 %v910
    %1711 = vmatpush1.bf16.msra.mxu0 %v909
    %1712 = vmatprep.subr.bf16.mxu0 %v970
    %1713 = vmatpush2.bf16.msra.mxu0 %v969
    %1714 = vmatprep.subr.bf16.mxu0 %v966
    %1715 = vmatpush2.bf16.msra.mxu0 %v965
    %1716 = vmatprep.subr.bf16.mxu0 %v962
    %1717 = vmatpush2.bf16.msra.mxu0 %v961
    %1718 = vmatprep.subr.bf16.mxu0 %v958
    %1719 = vmatpush2.bf16.msra.mxu0 %v957
    %1720 = vmatprep.subr.bf16.mxu0 %v954
    %1721 = vmatpush2.bf16.msra.mxu0 %v953
    %1722 = vmatprep.subr.bf16.mxu0 %v950
    %1723 = vmatpush2.bf16.msra.mxu0 %v949
    %1724 = vmatprep.subr.bf16.mxu0 %v946
    %1725 = vmatpush2.bf16.msra.mxu0 %v945
    %1726 = vmatprep.subr.bf16.mxu0 %v942
    %1727 = vmatpush2.bf16.msra.mxu0 %v941
    %1728 = vmatprep.mubr.bf16.mxu0 %v1034
    %1729 = vmatmul.mubr.bf16.gmra.mxu0 %v1033
    %v1730 = vpop.f32.mrf.mxu0
    %v1731 = vadd.f32 %v1688, %v1730
    %v1732 = vpop.f32.mrf.mxu0
    %v1733 = vadd.f32 %v1690, %v1732
    %v1734 = vpop.f32.mrf.mxu0
    %v1735 = vadd.f32 %v1692, %v1734
    %v1736 = vpop.f32.mrf.mxu0
    %v1737 = vadd.f32 %v1694, %v1736
    %1738 = vdwg.mxu0
    %v1740 = vlaneseq
    %v1741 = vshrl.u32 %v1740, 7
    %v1742 = vsub.s32 0, %v1741
    %v1743 = vrot.slane %v392, %v1742
    %v1744 = vlaneseq
    %v1745 = vshrl.u32 %v1744, 7
    %v1746 = vsub.s32 1, %v1745
    %v1747 = vrot.slane %v392, %v1746
    %v1748 = vlaneseq
    %v1749 = vshrl.u32 %v1748, 7
    %v1750 = vsub.s32 2, %v1749
    %v1751 = vrot.slane %v392, %v1750
    %v1752 = vlaneseq
    %v1753 = vshrl.u32 %v1752, 7
    %v1754 = vsub.s32 3, %v1753
    %v1755 = vrot.slane %v392, %v1754
    %v1760 = vmul.f32 %v1387, %v1743
    %v1761 = vmul.f32 %v1389, %v1747
    %v1762 = vmul.f32 %v1731, %v1751
    %v1763 = vmul.f32 %v1733, %v1755
    %v1764 = vmul.f32 %v1391, %v1743
    %v1765 = vmul.f32 %v1393, %v1747
    %v1766 = vmul.f32 %v1735, %v1751
    %v1767 = vmul.f32 %v1737, %v1755
    %v1769 = vlaneseq
    %v1770 = vshrl.u32 %v1769, 7
    %v1771 = vsub.s32 0, %v1770
    %v1772 = vrot.slane %v393, %v1771
    %v1773 = vlaneseq
    %v1774 = vshrl.u32 %v1773, 7
    %v1775 = vsub.s32 1, %v1774
    %v1776 = vrot.slane %v393, %v1775
    %v1777 = vlaneseq
    %v1778 = vshrl.u32 %v1777, 7
    %v1779 = vsub.s32 2, %v1778
    %v1780 = vrot.slane %v393, %v1779
    %v1781 = vlaneseq
    %v1782 = vshrl.u32 %v1781, 7
    %v1783 = vsub.s32 3, %v1782
    %v1784 = vrot.slane %v393, %v1783
    %v1789 = vadd.f32 %v1760, %v1772
    %v1790 = vadd.f32 %v1761, %v1776
    %v1791 = vadd.f32 %v1762, %v1780
    %v1792 = vadd.f32 %v1763, %v1784
    %v1793 = vadd.f32 %v1764, %v1772
    %v1794 = vadd.f32 %v1765, %v1776
    %v1795 = vadd.f32 %v1766, %v1780
    %v1796 = vadd.f32 %v1767, %v1784
    %v1797 = vmax.f32 %v1789, 0.0
    %v1798 = vmax.f32 %v1790, 0.0
    %v1799 = vmax.f32 %v1791, 0.0
    %v1800 = vmax.f32 %v1792, 0.0
    %v1801 = vmax.f32 %v1793, 0.0
    %v1802 = vmax.f32 %v1794, 0.0
    %v1803 = vmax.f32 %v1795, 0.0
    %v1804 = vmax.f32 %v1796, 0.0
    %v1805 = vpack.c.bf16 %v1801, %v1797
    %v1806 = vpack.c.bf16 %v1802, %v1798
    %v1807 = vpack.c.bf16 %v1803, %v1799
    %v1808 = vpack.c.bf16 %v1804, %v1800
    %v1810 = vlaneseq
    %v1811 = vshrl.u32 %v1810, 7
    %v1812 = vsub.s32 0, %v1811
    %v1813 = vrot.slane %v458, %v1812
    %v1879 = vunpack.c.l.b16 %v394
    %v1880 = vunpack.c.l.b16 %v395
    %v1881 = vunpack.c.l.b16 %v396
    %v1882 = vunpack.c.l.b16 %v397
    %v1883 = vunpack.c.l.b16 %v398
    %v1884 = vunpack.c.l.b16 %v399
    %v1885 = vunpack.c.l.b16 %v400
    %v1886 = vunpack.c.l.b16 %v401
    %v1887 = vunpack.c.l.b16 %v402
    %v1888 = vunpack.c.l.b16 %v403
    %v1889 = vunpack.c.l.b16 %v404
    %v1890 = vunpack.c.l.b16 %v405
    %v1891 = vunpack.c.l.b16 %v406
    %v1892 = vunpack.c.l.b16 %v407
    %v1893 = vunpack.c.l.b16 %v408
    %v1894 = vunpack.c.l.b16 %v409
    %v1895 = vunpack.c.l.b16 %v410
    %v1896 = vunpack.c.l.b16 %v411
    %v1897 = vunpack.c.l.b16 %v412
    %v1898 = vunpack.c.l.b16 %v413
    %v1899 = vunpack.c.l.b16 %v414
    %v1900 = vunpack.c.l.b16 %v415
    %v1901 = vunpack.c.l.b16 %v416
    %v1902 = vunpack.c.l.b16 %v417
    %v1903 = vunpack.c.l.b16 %v418
    %v1904 = vunpack.c.l.b16 %v419
    %v1905 = vunpack.c.l.b16 %v420
    %v1906 = vunpack.c.l.b16 %v421
    %v1907 = vunpack.c.l.b16 %v422
    %v1908 = vunpack.c.l.b16 %v423
    %v1909 = vunpack.c.l.b16 %v424
    %v1910 = vunpack.c.l.b16 %v425
    %v1911 = vunpack.c.l.b16 %v426
    %v1912 = vunpack.c.l.b16 %v427
    %v1913 = vunpack.c.l.b16 %v428
    %v1914 = vunpack.c.l.b16 %v429
    %v1915 = vunpack.c.l.b16 %v430
    %v1916 = vunpack.c.l.b16 %v431
    %v1917 = vunpack.c.l.b16 %v432
    %v1918 = vunpack.c.l.b16 %v433
    %v1919 = vunpack.c.l.b16 %v434
    %v1920 = vunpack.c.l.b16 %v435
    %v1921 = vunpack.c.l.b16 %v436
    %v1922 = vunpack.c.l.b16 %v437
    %v1923 = vunpack.c.l.b16 %v438
    %v1924 = vunpack.c.l.b16 %v439
    %v1925 = vunpack.c.l.b16 %v440
    %v1926 = vunpack.c.l.b16 %v441
    %v1927 = vunpack.c.l.b16 %v442
    %v1928 = vunpack.c.l.b16 %v443
    %v1929 = vunpack.c.l.b16 %v444
    %v1930 = vunpack.c.l.b16 %v445
    %v1931 = vunpack.c.l.b16 %v446
    %v1932 = vunpack.c.l.b16 %v447
    %v1933 = vunpack.c.l.b16 %v448
    %v1934 = vunpack.c.l.b16 %v449
    %v1935 = vunpack.c.l.b16 %v450
    %v1936 = vunpack.c.l.b16 %v451
    %v1937 = vunpack.c.l.b16 %v452
    %v1938 = vunpack.c.l.b16 %v453
    %v1939 = vunpack.c.l.b16 %v454
    %v1940 = vunpack.c.l.b16 %v455
    %v1941 = vunpack.c.l.b16 %v456
    %v1942 = vunpack.c.l.b16 %v457
    %v1943 = vpack.c.b16 %v1880, %v1879
    %v1944 = vpack.c.b16 %v1882, %v1881
    %v1945 = vpack.c.b16 %v1884, %v1883
    %v1946 = vpack.c.b16 %v1886, %v1885
    %v1947 = vpack.c.b16 %v1888, %v1887
    %v1948 = vpack.c.b16 %v1890, %v1889
    %v1949 = vpack.c.b16 %v1892, %v1891
    %v1950 = vpack.c.b16 %v1894, %v1893
    %v1951 = vpack.c.b16 %v1896, %v1895
    %v1952 = vpack.c.b16 %v1898, %v1897
    %v1953 = vpack.c.b16 %v1900, %v1899
    %v1954 = vpack.c.b16 %v1902, %v1901
    %v1955 = vpack.c.b16 %v1904, %v1903
    %v1956 = vpack.c.b16 %v1906, %v1905
    %v1957 = vpack.c.b16 %v1908, %v1907
    %v1958 = vpack.c.b16 %v1910, %v1909
    %v1959 = vpack.c.b16 %v1912, %v1911
    %v1960 = vpack.c.b16 %v1914, %v1913
    %v1961 = vpack.c.b16 %v1916, %v1915
    %v1962 = vpack.c.b16 %v1918, %v1917
    %v1963 = vpack.c.b16 %v1920, %v1919
    %v1964 = vpack.c.b16 %v1922, %v1921
    %v1965 = vpack.c.b16 %v1924, %v1923
    %v1966 = vpack.c.b16 %v1926, %v1925
    %v1967 = vpack.c.b16 %v1928, %v1927
    %v1968 = vpack.c.b16 %v1930, %v1929
    %v1969 = vpack.c.b16 %v1932, %v1931
    %v1970 = vpack.c.b16 %v1934, %v1933
    %v1971 = vpack.c.b16 %v1936, %v1935
    %v1972 = vpack.c.b16 %v1938, %v1937
    %v1973 = vpack.c.b16 %v1940, %v1939
    %v1974 = vpack.c.b16 %v1942, %v1941
    %2007 = vmatprep.subr.bf16.mxu0 0
    %2008 = vmatpush1.bf16.msra.mxu0 %v1950
    %2009 = vmatprep.subr.bf16.mxu0 0
    %2010 = vmatpush1.bf16.msra.mxu0 %v1949
    %2011 = vmatprep.subr.bf16.mxu0 0
    %2012 = vmatpush1.bf16.msra.mxu0 %v1948
    %2013 = vmatprep.subr.bf16.mxu0 0
    %2014 = vmatpush1.bf16.msra.mxu0 %v1947
    %2015 = vmatprep.subr.bf16.mxu0 0
    %2016 = vmatpush1.bf16.msra.mxu0 %v1946
    %2017 = vmatprep.subr.bf16.mxu0 0
    %2018 = vmatpush1.bf16.msra.mxu0 %v1945
    %2019 = vmatprep.subr.bf16.mxu0 0
    %2020 = vmatpush1.bf16.msra.mxu0 %v1944
    %2021 = vmatprep.subr.bf16.mxu0 0
    %2022 = vmatpush1.bf16.msra.mxu0 %v1943
    %2023 = vmatprep.subr.bf16.mxu0 0
    %2024 = vmatpush2.bf16.msra.mxu0 %v1958
    %2025 = vmatprep.subr.bf16.mxu0 0
    %2026 = vmatpush2.bf16.msra.mxu0 %v1957
    %2027 = vmatprep.subr.bf16.mxu0 0
    %2028 = vmatpush2.bf16.msra.mxu0 %v1956
    %2029 = vmatprep.subr.bf16.mxu0 0
    %2030 = vmatpush2.bf16.msra.mxu0 %v1955
    %2031 = vmatprep.subr.bf16.mxu0 0
    %2032 = vmatpush2.bf16.msra.mxu0 %v1954
    %2033 = vmatprep.subr.bf16.mxu0 0
    %2034 = vmatpush2.bf16.msra.mxu0 %v1953
    %2035 = vmatprep.subr.bf16.mxu0 0
    %2036 = vmatpush2.bf16.msra.mxu0 %v1952
    %2037 = vmatprep.subr.bf16.mxu0 0
    %2038 = vmatpush2.bf16.msra.mxu0 %v1951
    %2039 = vmatprep.mubr.bf16.mxu0 %v1806
    %2040 = vmatmul.mubr.bf16.gmra.mxu0 %v1805
    %v2041 = vpop.f32.mrf.mxu0
    %v2042 = vadd.f32 %v1813, %v2041
    %v2043 = vpop.f32.mrf.mxu0
    %v2044 = vpop.f32.mrf.mxu0
    %v2045 = vadd.f32 %v1813, %v2044
    %v2046 = vpop.f32.mrf.mxu0
    %2047 = vdwg.mxu0
    %2048 = vmatprep.subr.bf16.mxu0 0
    %2049 = vmatpush1.bf16.msra.mxu0 %v1966
    %2050 = vmatprep.subr.bf16.mxu0 0
    %2051 = vmatpush1.bf16.msra.mxu0 %v1965
    %2052 = vmatprep.subr.bf16.mxu0 0
    %2053 = vmatpush1.bf16.msra.mxu0 %v1964
    %2054 = vmatprep.subr.bf16.mxu0 0
    %2055 = vmatpush1.bf16.msra.mxu0 %v1963
    %2056 = vmatprep.subr.bf16.mxu0 0
    %2057 = vmatpush1.bf16.msra.mxu0 %v1962
    %2058 = vmatprep.subr.bf16.mxu0 0
    %2059 = vmatpush1.bf16.msra.mxu0 %v1961
    %2060 = vmatprep.subr.bf16.mxu0 0
    %2061 = vmatpush1.bf16.msra.mxu0 %v1960
    %2062 = vmatprep.subr.bf16.mxu0 0
    %2063 = vmatpush1.bf16.msra.mxu0 %v1959
    %2064 = vmatprep.subr.bf16.mxu0 0
    %2065 = vmatpush2.bf16.msra.mxu0 %v1974
    %2066 = vmatprep.subr.bf16.mxu0 0
    %2067 = vmatpush2.bf16.msra.mxu0 %v1973
    %2068 = vmatprep.subr.bf16.mxu0 0
    %2069 = vmatpush2.bf16.msra.mxu0 %v1972
    %2070 = vmatprep.subr.bf16.mxu0 0
    %2071 = vmatpush2.bf16.msra.mxu0 %v1971
    %2072 = vmatprep.subr.bf16.mxu0 0
    %2073 = vmatpush2.bf16.msra.mxu0 %v1970
    %2074 = vmatprep.subr.bf16.mxu0 0
    %2075 = vmatpush2.bf16.msra.mxu0 %v1969
    %2076 = vmatprep.subr.bf16.mxu0 0
    %2077 = vmatpush2.bf16.msra.mxu0 %v1968
    %2078 = vmatprep.subr.bf16.mxu0 0
    %2079 = vmatpush2.bf16.msra.mxu0 %v1967
    %2080 = vmatprep.mubr.bf16.mxu0 %v1808
    %2081 = vmatmul.mubr.bf16.gmra.mxu0 %v1807
    %v2082 = vpop.f32.mrf.mxu0
    %v2083 = vadd.f32 %v2042, %v2082
    %v2084 = vpop.f32.mrf.mxu0
    %v2085 = vpop.f32.mrf.mxu0
    %v2086 = vadd.f32 %v2045, %v2085
    %v2087 = vpop.f32.mrf.mxu0
    %2088 = vdwg.mxu0
    %v2089 = vmax.f32 %v2083, 0.0
    %v2090 = vmax.f32 %v2086, 0.0
    %v2091 = vld [vmem:[#allocation10] sm:$0xf]
    %v2092 = vld [vmem:[#allocation10 + $0x4] sm:$0xf]
    %v2093 = vld [vmem:[#allocation10 + $0x8] sm:$0xf]
    %v2094 = vld [vmem:[#allocation10 + $0xc] sm:$0xf]
    %v2095 = vld [vmem:[#allocation10 + $0x10] sm:$0xf]
    %v2096 = vld [vmem:[#allocation10 + $0x14] sm:$0xf]
    %v2097 = vld [vmem:[#allocation10 + $0x18] sm:$0xf]
    %v2098 = vld [vmem:[#allocation10 + $0x1c] sm:$0xf]
    %v2099 = vld [vmem:[#allocation10 + $0x20] sm:$0xf]
    %v2100 = vld [vmem:[#allocation10 + $0x24] sm:$0xf]
    %v2101 = vld [vmem:[#allocation10 + $0x28] sm:$0xf]
    %v2102 = vld [vmem:[#allocation10 + $0x2c] sm:$0xf]
    %v2103 = vld [vmem:[#allocation10 + $0x30] sm:$0xf]
    %v2104 = vld [vmem:[#allocation10 + $0x34] sm:$0xf]
    %v2105 = vld [vmem:[#allocation10 + $0x38] sm:$0xf]
    %v2106 = vld [vmem:[#allocation10 + $0x3c] sm:$0xf]
    %v2107 = vpack.c.bf16 %v2090, %v2089
    %v2108 = vld [vmem:[%s7] sm:$0x1]
    %v2110 = vlaneseq
    %v2111 = vshrl.u32 %v2110, 7
    %v2112 = vsub.s32 0, %v2111
    %v2113 = vrot.slane %v2108, %v2112
    %v2131 = vunpack.c.l.b16 %v2091
    %v2132 = vunpack.c.l.b16 %v2092
    %v2133 = vunpack.c.l.b16 %v2093
    %v2134 = vunpack.c.l.b16 %v2094
    %v2135 = vunpack.c.l.b16 %v2095
    %v2136 = vunpack.c.l.b16 %v2096
    %v2137 = vunpack.c.l.b16 %v2097
    %v2138 = vunpack.c.l.b16 %v2098
    %v2139 = vunpack.c.l.b16 %v2099
    %v2140 = vunpack.c.l.b16 %v2100
    %v2141 = vunpack.c.l.b16 %v2101
    %v2142 = vunpack.c.l.b16 %v2102
    %v2143 = vunpack.c.l.b16 %v2103
    %v2144 = vunpack.c.l.b16 %v2104
    %v2145 = vunpack.c.l.b16 %v2105
    %v2146 = vunpack.c.l.b16 %v2106
    %v2147 = vpack.c.b16 %v2132, %v2131
    %v2148 = vpack.c.b16 %v2134, %v2133
    %v2149 = vpack.c.b16 %v2136, %v2135
    %v2150 = vpack.c.b16 %v2138, %v2137
    %v2151 = vpack.c.b16 %v2140, %v2139
    %v2152 = vpack.c.b16 %v2142, %v2141
    %v2153 = vpack.c.b16 %v2144, %v2143
    %v2154 = vpack.c.b16 %v2146, %v2145
    %2163 = vmatprep.subr.bf16.mxu0 0
    %2164 = vmatpush1.bf16.msra.mxu0 %v2154
    %2165 = vmatprep.subr.bf16.mxu0 0
    %2166 = vmatpush1.bf16.msra.mxu0 %v2153
    %2167 = vmatprep.subr.bf16.mxu0 0
    %2168 = vmatpush1.bf16.msra.mxu0 %v2152
    %2169 = vmatprep.subr.bf16.mxu0 0
    %2170 = vmatpush1.bf16.msra.mxu0 %v2151
    %2171 = vmatprep.subr.bf16.mxu0 0
    %2172 = vmatpush1.bf16.msra.mxu0 %v2150
    %2173 = vmatprep.subr.bf16.mxu0 0
    %2174 = vmatpush1.bf16.msra.mxu0 %v2149
    %2175 = vmatprep.subr.bf16.mxu0 0
    %2176 = vmatpush1.bf16.msra.mxu0 %v2148
    %2177 = vmatprep.subr.bf16.mxu0 0
    %2178 = vmatpush1.bf16.msra.mxu0 %v2147
    %2179 = vmatprep.subr.bf16.mxu0 0
    %2180 = vmatpush2.bf16.msra.mxu0 0
    %2181 = vmatprep.subr.bf16.mxu0 0
    %2182 = vmatpush2.bf16.msra.mxu0 0
    %2183 = vmatprep.subr.bf16.mxu0 0
    %2184 = vmatpush2.bf16.msra.mxu0 0
    %2185 = vmatprep.subr.bf16.mxu0 0
    %2186 = vmatpush2.bf16.msra.mxu0 0
    %2187 = vmatprep.subr.bf16.mxu0 0
    %2188 = vmatpush2.bf16.msra.mxu0 0
    %2189 = vmatprep.subr.bf16.mxu0 0
    %2190 = vmatpush2.bf16.msra.mxu0 0
    %2191 = vmatprep.subr.bf16.mxu0 0
    %2192 = vmatpush2.bf16.msra.mxu0 0
    %2193 = vmatprep.subr.bf16.mxu0 0
    %2194 = vmatpush2.bf16.msra.mxu0 0
    %2195 = vmatprep.mubr.bf16.mxu0 0
    %2196 = vmatmul.mubr.bf16.gmra.mxu0 %v2107
    %v2197 = vpop.f32.mrf.mxu0
    %v2198 = vadd.f32 %v2113, %v2197
    %v2199 = vpop.f32.mrf.mxu0
    %v2200 = vpop.f32.mrf.mxu0
    %v2201 = vadd.f32 %v2113, %v2200
    %v2202 = vpop.f32.mrf.mxu0
    %2203 = vdwg.mxu0
    %2204 = vmax.xlane.f32.xlu0 %v2198
    %v2205 = vpop.xlane.xlu0 %2204
    %2206 = vmax.xlane.f32.xlu0 %v2201
    %v2207 = vpop.xlane.xlu0 %2206
    %v2208 = vsub.f32 %v2198, %v2205
    %v2209 = vsub.f32 %v2201, %v2207
    %v2210 = vmul.f32 %v2208, 1.442695
    %v2211 = vpow.pop %v2210
    %v2212 = vmul.f32 %v2209, 1.442695
    %v2213 = vpow.pop %v2212
    %2214 = vadd.xlane.f32.xlu0 %v2211
    %v2215 = vpop.xlane.xlu0 %2214
    %2216 = vadd.xlane.f32.xlu0 %v2213
    %v2217 = vpop.xlane.xlu0 %2216
    %v2218 = vlog2.pop %v2215
    %v2219 = vmul.f32 %v2218, 0.6931472
    %v2220 = vlog2.pop %v2217
    %v2221 = vmul.f32 %v2220, 0.6931472
    %v2222 = vsub.f32 %v2208, %v2219
    %v2223 = vsub.f32 %v2209, %v2221
    %2224 = vst [vmem:[#allocation13] sm:$0xff] %v2222
    %2225 = vst [vmem:[#allocation13 + $0x8] sm:$0xff] %v2223
    %v2226 = vld [vmem:[%s5] sm:$0x1]
    %v2227 = vmul.f32 %v2083, 5.0
    %v2228 = vmul.f32 %v2086, 5.0
    %v2229 = vmul.f32 %v2226, 3.0
    %v2231 = vlaneseq
    %v2232 = vshrl.u32 %v2231, 7
    %v2233 = vsub.s32 0, %v2232
    %v2234 = vrot.slane %v2229, %v2233
    %v2236 = vsub.f32 %v2227, %v2234
    %v2237 = vsub.f32 %v2228, %v2234
    %v2238 = vmax.f32 %v2236, 0.0
    %v2239 = vmax.f32 %v2237, 0.0
    %v2240 = vadd.f32 %v2089, %v2238
    %v2241 = vadd.f32 %v2090, %v2239
    %v2242 = vadd.f32 %v2089, %v2240
    %v2243 = vadd.f32 %v2090, %v2241
    %v2244 = vld [vmem:[#allocation11] sm:$0xf]
    %v2245 = vld [vmem:[#allocation11 + $0x4] sm:$0xf]
    %v2246 = vld [vmem:[#allocation11 + $0x8] sm:$0xf]
    %v2247 = vld [vmem:[#allocation11 + $0xc] sm:$0xf]
    %v2248 = vld [vmem:[#allocation11 + $0x10] sm:$0xf]
    %v2249 = vld [vmem:[#allocation11 + $0x14] sm:$0xf]
    %v2250 = vld [vmem:[#allocation11 + $0x18] sm:$0xf]
    %v2251 = vld [vmem:[#allocation11 + $0x1c] sm:$0xf]
    %v2252 = vld [vmem:[#allocation11 + $0x20] sm:$0xf]
    %v2253 = vld [vmem:[#allocation11 + $0x24] sm:$0xf]
    %v2254 = vld [vmem:[#allocation11 + $0x28] sm:$0xf]
    %v2255 = vld [vmem:[#allocation11 + $0x2c] sm:$0xf]
    %v2256 = vld [vmem:[#allocation11 + $0x30] sm:$0xf]
    %v2257 = vld [vmem:[#allocation11 + $0x34] sm:$0xf]
    %v2258 = vld [vmem:[#allocation11 + $0x38] sm:$0xf]
    %v2259 = vld [vmem:[#allocation11 + $0x3c] sm:$0xf]
    %v2260 = vpack.c.bf16 %v2243, %v2242
    %v2261 = vld [vmem:[%s9] sm:$0x1]
    %v2263 = vlaneseq
    %v2264 = vshrl.u32 %v2263, 7
    %v2265 = vsub.s32 0, %v2264
    %v2266 = vrot.slane %v2261, %v2265
    %v2284 = vunpack.c.l.b16 %v2244
    %v2285 = vunpack.c.l.b16 %v2245
    %v2286 = vunpack.c.l.b16 %v2246
    %v2287 = vunpack.c.l.b16 %v2247
    %v2288 = vunpack.c.l.b16 %v2248
    %v2289 = vunpack.c.l.b16 %v2249
    %v2290 = vunpack.c.l.b16 %v2250
    %v2291 = vunpack.c.l.b16 %v2251
    %v2292 = vunpack.c.l.b16 %v2252
    %v2293 = vunpack.c.l.b16 %v2253
    %v2294 = vunpack.c.l.b16 %v2254
    %v2295 = vunpack.c.l.b16 %v2255
    %v2296 = vunpack.c.l.b16 %v2256
    %v2297 = vunpack.c.l.b16 %v2257
    %v2298 = vunpack.c.l.b16 %v2258
    %v2299 = vunpack.c.l.b16 %v2259
    %v2300 = vpack.c.b16 %v2285, %v2284
    %v2301 = vpack.c.b16 %v2287, %v2286
    %v2302 = vpack.c.b16 %v2289, %v2288
    %v2303 = vpack.c.b16 %v2291, %v2290
    %v2304 = vpack.c.b16 %v2293, %v2292
    %v2305 = vpack.c.b16 %v2295, %v2294
    %v2306 = vpack.c.b16 %v2297, %v2296
    %v2307 = vpack.c.b16 %v2299, %v2298
    %2316 = vmatprep.subr.bf16.mxu0 0
    %2317 = vmatpush1.bf16.msra.mxu0 %v2307
    %2318 = vmatprep.subr.bf16.mxu0 0
    %2319 = vmatpush1.bf16.msra.mxu0 %v2306
    %2320 = vmatprep.subr.bf16.mxu0 0
    %2321 = vmatpush1.bf16.msra.mxu0 %v2305
    %2322 = vmatprep.subr.bf16.mxu0 0
    %2323 = vmatpush1.bf16.msra.mxu0 %v2304
    %2324 = vmatprep.subr.bf16.mxu0 0
    %2325 = vmatpush1.bf16.msra.mxu0 %v2303
    %2326 = vmatprep.subr.bf16.mxu0 0
    %2327 = vmatpush1.bf16.msra.mxu0 %v2302
    %2328 = vmatprep.subr.bf16.mxu0 0
    %2329 = vmatpush1.bf16.msra.mxu0 %v2301
    %2330 = vmatprep.subr.bf16.mxu0 0
    %2331 = vmatpush1.bf16.msra.mxu0 %v2300
    %2332 = vmatprep.subr.bf16.mxu0 0
    %2333 = vmatpush2.bf16.msra.mxu0 0
    %2334 = vmatprep.subr.bf16.mxu0 0
    %2335 = vmatpush2.bf16.msra.mxu0 0
    %2336 = vmatprep.subr.bf16.mxu0 0
    %2337 = vmatpush2.bf16.msra.mxu0 0
    %2338 = vmatprep.subr.bf16.mxu0 0
    %2339 = vmatpush2.bf16.msra.mxu0 0
    %2340 = vmatprep.subr.bf16.mxu0 0
    %2341 = vmatpush2.bf16.msra.mxu0 0
    %2342 = vmatprep.subr.bf16.mxu0 0
    %2343 = vmatpush2.bf16.msra.mxu0 0
    %2344 = vmatprep.subr.bf16.mxu0 0
    %2345 = vmatpush2.bf16.msra.mxu0 0
    %2346 = vmatprep.subr.bf16.mxu0 0
    %2347 = vmatpush2.bf16.msra.mxu0 0
    %2348 = vmatprep.mubr.bf16.mxu0 0
    %2349 = vmatmul.mubr.bf16.gmra.mxu0 %v2260
    %v2350 = vpop.f32.mrf.mxu0
    %v2351 = vadd.f32 %v2266, %v2350
    %v2352 = vpop.f32.mrf.mxu0
    %v2353 = vpop.f32.mrf.mxu0
    %v2354 = vadd.f32 %v2266, %v2353
    %v2355 = vpop.f32.mrf.mxu0
    %2356 = vdwg.mxu0
    %2357 = vmax.xlane.f32.xlu0 %v2351
    %v2358 = vpop.xlane.xlu0 %2357
    %2359 = vmax.xlane.f32.xlu0 %v2354
    %v2360 = vpop.xlane.xlu0 %2359
    %v2361 = vsub.f32 %v2351, %v2358
    %v2362 = vsub.f32 %v2354, %v2360
    %v2363 = vmul.f32 %v2361, 1.442695
    %v2364 = vpow.pop %v2363
    %v2365 = vmul.f32 %v2362, 1.442695
    %v2366 = vpow.pop %v2365
    %2367 = vadd.xlane.f32.xlu0 %v2364
    %v2368 = vpop.xlane.xlu0 %2367
    %2369 = vadd.xlane.f32.xlu0 %v2366
    %v2370 = vpop.xlane.xlu0 %2369
    %v2371 = vlog2.pop %v2368
    %v2372 = vmul.f32 %v2371, 0.6931472
    %v2373 = vlog2.pop %v2370
    %v2374 = vmul.f32 %v2373, 0.6931472
    %v2375 = vsub.f32 %v2361, %v2372
    %v2376 = vsub.f32 %v2362, %v2374
    %2377 = vst [vmem:[#allocation14] sm:$0xff] %v2375
    %2378 = vst [vmem:[#allocation14 + $0x8] sm:$0xff] %v2376
    // Predicated region
    $region66: #{tpu_custom_call.1} parent=1 // pred_check
      _
    $region67: #{tpu_custom_call.1} parent=1 // pred_check_branch
      %2380 = sbr.rel (0) target = $region69
    $region68: #{tpu_custom_call.1} parent=1 // pred_region
      %s2382 = ssub.s32 256, 256
      %2383 = vsyncadd [#allocation4], %s2382
      %s2384 = sshll.u32 [#allocation13], 4
      %s2385 = int_to_ptr.vmem [resolvable:$true] %s2384
      %2390 = dma.vmem_to_hbm [thread:$0]  %s2385, 256, %s10, [#allocation4], 128, 128, 8
    $region69: #{tpu_custom_call.1} parent=1 // pred_fallthru
      _
    // Predicated region
    $region70: #{tpu_custom_call.1} parent=1 // pred_check
      _
    $region71: #{tpu_custom_call.1} parent=1 // pred_check_branch
      %2392 = sbr.rel (0) target = $region73
    $region72: #{tpu_custom_call.1} parent=1 // pred_region
      %s2394 = ssub.s32 256, 256
      %2395 = vsyncadd [#allocation15], %s2394
      %s2396 = sshll.u32 [#allocation14], 4
      %s2397 = int_to_ptr.vmem [resolvable:$true] %s2396
      %2402 = dma.vmem_to_hbm [thread:$0]  %s2397, 256, %s11, [#allocation15], 128, 128, 8
    $region73: #{tpu_custom_call.1} parent=1 // pred_fallthru
      _
    // Predicated region
    $region74: #{tpu_custom_call.1} parent=1 // pred_check
      _
    $region75: #{tpu_custom_call.1} parent=1 // pred_check_branch
      %2404 = sbr.rel (0) target = $region77
    $region76: #{tpu_custom_call.1} parent=1 // pred_region
      %2405 = dma.done [#allocation4], 256
    $region77: #{tpu_custom_call.1} parent=1 // pred_fallthru
      _
    // Predicated region
    $region78: #{tpu_custom_call.1} parent=1 // pred_check
      _
    $region79: #{tpu_custom_call.1} parent=1 // pred_check_branch
      %2407 = sbr.rel (0) target = $region81
    $region80: #{tpu_custom_call.1} parent=1 // pred_region
      %2408 = dma.done [#allocation15], 256
    $region81: #{tpu_custom_call.1} parent=1 // pred_fallthru
      _
    %2409 = vsyncpa [#allocation3], 1
    %2410 = vsyncpa [#allocation6], 1
    %2411 = vsyncpa [#allocation9], 1
    %2412 = vsyncpa [#allocation12], 1
    %2413 = vsyncpa [#allocation4], 1
    %2414 = vsyncpa [#allocation15], 1

</llo_original>
